<compile_context>
chip_gen: v6e
topology: v6e:2x2x1
jax: 0.10.0
libtpu: 0.0.40
codegen_flags: <defaults>
</compile_context>

<pallas_src>
import math

import jax
import jax.numpy as jnp
from jax import lax
from jax.experimental import pallas as pl
from jax.experimental.pallas import tpu as pltpu

# ----- small, module-consistent shapes -----
B = 2            # batch
L = 8            # sequence length
E = 32           # hidden_size (all_head_size)
H = 4            # num_attention_heads
Dh = E // H      # attention_head_size = 8
Dh2 = Dh // 2    # rotary half dim = 4
MAX_POS = 16     # size of the sinusoidal position table
SCALE = 1.0 / math.sqrt(Dh)


# ---------------- Pallas kernel (one batch element per grid step) ----------------
def attn_kernel(h_ref, w_ref, b_ref, cos_ref, sin_ref, mask_ref, out_ref):
    # h_ref:    (1, L, E)   hidden states for this batch element
    # w_ref:    (E, 5E)     fused [Qg | Qg_swapped | Kg | Kg_swapped | V] weights
    # b_ref:    (1, 5E)     fused bias row
    # cos_ref:  (1, L, E)   per-head-tiled [cos|cos] rotary multipliers
    # sin_ref:  (1, L, E)   per-head-tiled [-sin|sin] rotary multipliers
    # mask_ref: (1, 1, L)   additive attention mask (broadcast over queries)
    # out_ref:  (1, L, E)   final context (heads interleaved), lane-dense store
    x = h_ref[0]                                                     # (L, E)

    # Single fused projection for all heads + folded bias.
    qkv = jnp.dot(x, w_ref[...], preferred_element_type=jnp.float32) + b_ref[...]

    cos2 = cos_ref[0]                                                # (L, E)
    sin2 = sin_ref[0]                                                # (L, E)

    q_c = qkv[:, 0 * E:1 * E]        # Q, grouped (even|odd) per-head layout
    q_s = qkv[:, 1 * E:2 * E]        # Q with halves pre-swapped per head
    k_c = qkv[:, 2 * E:3 * E]
    k_s = qkv[:, 3 * E:4 * E]
    v   = qkv[:, 4 * E:5 * E]        # V in the original head layout

    # Rotary embedding as full-width elementwise ops (the "swap" rode the MXU).
    qr = q_c * cos2 + q_s * sin2                                     # (L, E)
    kr = k_c * cos2 + k_s * sin2                                     # (L, E)

    mask_row = mask_ref[0]                                           # (1, L)

    # Per-head attention (H=4, unrolled at trace time).  Scores are invariant
    # to the per-head (even|odd) column permutation applied identically to Q/K.
    ctx = []
    for h in range(H):
        sl = slice(h * Dh, (h + 1) * Dh)
        s = lax.dot_general(qr[:, sl], kr[:, sl],
                            (((1,), (1,)), ((), ())),                # q @ k.T, no transpose
                            preferred_element_type=jnp.float32) * SCALE
        s = s + mask_row
        s = s - jnp.max(s, axis=-1, keepdims=True)
        p = jnp.exp(s)
        p = p * pl.reciprocal(jnp.sum(p, axis=-1, keepdims=True), approx=True)
        # dropout(p) is identity in eval mode; head_mask is None.
        ctx.append(jnp.dot(p, v[:, sl], preferred_element_type=jnp.float32))

    # Heads re-interleaved -> (L, E) lane-dense (32-wide) store; no wrapper transpose.
    out_ref[0] = jnp.concatenate(ctx, axis=-1)


# ---------------- wrapper (glue) ----------------
def roformer_self_attention(hidden, pos_ids, sin_table, cos_table,
                            Wq, bq, Wk, bk, Wv, bv, ext_mask):
    """hidden: (B, L, E); pos_ids: (B, L) int32;
    sin/cos_table: (1, 1, MAX_POS, Dh2); W*: (E, E) torch Linear weight
    (out, in); b*: (E,); ext_mask: (B, 1, 1, L) additive mask."""
    # gather sinusoidal tables at pos_ids (pure indexing glue)
    sin = sin_table[0, 0][pos_ids]                     # (B, L, Dh2)
    cos = cos_table[0, 0][pos_ids]                     # (B, L, Dh2)

    # Full-width rotary multipliers: per head block of Dh,
    #   cos2 = [cos | cos],  sin2 = [-sin | +sin]   (tiled over H heads)
    cos2 = jnp.tile(jnp.concatenate([cos, cos], axis=-1), (1, 1, H))   # (B, L, E)
    sin2 = jnp.tile(jnp.concatenate([-sin, sin], axis=-1), (1, 1, H))  # (B, L, E)

    # Column permutations (per head):
    #   perm_g : grouped rotary layout [even dims | odd dims]
    #   perm_s : the same layout with halves swapped  [odd | even]
    idx = jnp.arange(E)
    head = idx // Dh
    within = idx % Dh
    perm_g = head * Dh + jnp.where(within < Dh2, 2 * within, 2 * (within - Dh2) + 1)
    perm_s = head * Dh + jnp.where(within < Dh2, 2 * within + 1, 2 * (within - Dh2))

    WqT, WkT, WvT = Wq.T, Wk.T, Wv.T                   # y = x @ W.T layout
    W_fused = jnp.concatenate(
        [WqT[:, perm_g], WqT[:, perm_s],
         WkT[:, perm_g], WkT[:, perm_s], WvT], axis=1)                 # (E, 5E)
    b_fused = jnp.concatenate(
        [bq[perm_g], bq[perm_s], bk[perm_g], bk[perm_s], bv]).reshape(1, 5 * E)

    mask = ext_mask.reshape(B, 1, L)                   # (B, 1, L)

    out = pl.pallas_call(
        attn_kernel,
        out_shape=jax.ShapeDtypeStruct((B, L, E), jnp.float32),
        grid=(B,),
        in_specs=[
            pl.BlockSpec((1, L, E), lambda b: (b, 0, 0)),      # hidden
            pl.BlockSpec((E, 5 * E), lambda b: (0, 0)),        # fused W (resident)
            pl.BlockSpec((1, 5 * E), lambda b: (0, 0)),        # fused bias
            pl.BlockSpec((1, L, E), lambda b: (b, 0, 0)),      # cos2
            pl.BlockSpec((1, L, E), lambda b: (b, 0, 0)),      # sin2
            pl.BlockSpec((1, 1, L), lambda b: (b, 0, 0)),      # additive mask
        ],
        out_specs=pl.BlockSpec((1, L, E), lambda b: (b, 0, 0)),
        compiler_params=pltpu.CompilerParams(
            dimension_semantics=("parallel",)),                # one batch per TC on v7x
    )(hidden, W_fused, b_fused, cos2, sin2, mask)

    return out                                          # already (B, L, all_head_size)


# ---------------- pure-JAX reference (mirrors the PyTorch code) ----------------
def reference(hidden, pos_ids, sin_table, cos_table, Wq, bq, Wk, bk, Wv, bv, ext_mask):
    def t4s(x):
        return jnp.transpose(x.reshape(B, L, H, Dh), (0, 2, 1, 3))

    q = t4s(hidden @ Wq.T + bq)
    k = t4s(hidden @ Wk.T + bk)
    v = t4s(hidden @ Wv.T + bv)

    sin = sin_table[0, 0][pos_ids][:, None]            # (B, 1, L, Dh2)
    cos = cos_table[0, 0][pos_ids][:, None]

    def rot(x):
        x1, x2 = x[..., 0::2], x[..., 1::2]
        return jnp.stack([x1 * cos - x2 * sin, x2 * cos + x1 * sin],
                         axis=-1).reshape(x.shape)

    q = rot(q)
    k = rot(k)
    s = jnp.einsum('bhqd,bhkd->bhqk', q, k) / math.sqrt(Dh) + ext_mask
    p = jax.nn.softmax(s, axis=-1)
    ctx = jnp.einsum('bhqk,bhkd->bhqd', p, v)
    return jnp.transpose(ctx, (0, 2, 1, 3)).reshape(B, L, E)


if __name__ == "__main__":
    key = jax.random.PRNGKey(0)
    k_h, k_wq, k_bq, k_wk, k_bk, k_wv, k_bv = jax.random.split(key, 7)

    hidden = jax.random.normal(k_h, (B, L, E), dtype=jnp.float32)

    # deterministic Linear parameters (torch layout: weight (out, in), bias (out,))
    Wq = jax.random.normal(k_wq, (E, E), dtype=jnp.float32) * 0.05
    bq = jax.random.normal(k_bq, (E,), dtype=jnp.float32) * 0.05
    Wk = jax.random.normal(k_wk, (E, E), dtype=jnp.float32) * 0.05
    bk = jax.random.normal(k_bk, (E,), dtype=jnp.float32) * 0.05
    Wv = jax.random.normal(k_wv, (E, E), dtype=jnp.float32) * 0.05
    bv = jax.random.normal(k_bv, (E,), dtype=jnp.float32) * 0.05

    # sinusoidal position tables: shape (1, 1, MAX_POS, Dh//2)
    pos = jnp.arange(MAX_POS, dtype=jnp.float32)[:, None]                 # (MAX_POS, 1)
    inv_freq = 1.0 / (10000.0 ** (jnp.arange(0, Dh, 2, dtype=jnp.float32) / Dh))
    angles = pos * inv_freq[None, :]                                      # (MAX_POS, Dh2)
    sin_table = jnp.sin(angles)[None, None]
    cos_table = jnp.cos(angles)[None, None]

    # position ids (B, L) within the table
    pos_ids = jnp.stack([jnp.arange(L, dtype=jnp.int32),
                         jnp.arange(L, dtype=jnp.int32) + 4])

    # additive attention mask (B, 1, 1, L): batch 1 masks out the last 2 keys
    valid = jnp.array([[1.0] * L, [1.0] * (L - 2) + [0.0] * 2], dtype=jnp.float32)
    ext_mask = (1.0 - valid)[:, None, None, :] * -10000.0

    out = roformer_self_attention(hidden, pos_ids, sin_table, cos_table,
                                  Wq, bq, Wk, bk, Wv, bv, ext_mask)
    out = jax.block_until_ready(out)

    ref = reference(hidden, pos_ids, sin_table, cos_table,
                    Wq, bq, Wk, bk, Wv, bv, ext_mask)
    assert out.shape == (B, L, E)
    # 5e-3 tolerance covers the approximate EUP reciprocal in the softmax;
    # any layout / permutation / mask bug would produce O(0.1) errors.
    assert jnp.allclose(out, ref, rtol=5e-3, atol=5e-3), \
        f"max abs err {jnp.max(jnp.abs(out - ref))}"
    print("KERNEL_OK")
</pallas_src>

<mosaic_0001>
module attributes {stable_mosaic.version = 11 : i64} {
  func.func @attn_kernel(%arg0: i32, %arg1: memref<1x8x32xf32, #tpu.memory_space<vmem>>, %arg2: memref<32x160xf32, #tpu.memory_space<vmem>>, %arg3: memref<1x160xf32, #tpu.memory_space<vmem>>, %arg4: memref<1x8x32xf32, #tpu.memory_space<vmem>>, %arg5: memref<1x8x32xf32, #tpu.memory_space<vmem>>, %arg6: memref<1x1x8xf32, #tpu.memory_space<vmem>>, %arg7: memref<1x8x32xf32, #tpu.memory_space<vmem>>) attributes {dimension_semantics = [#tpu.dimension_semantics<parallel>], iteration_bounds = array<i64: 2>, scalar_prefetch = 0 : i64, scratch_operands = 0 : i64, tpu.core_type = #tpu.core_type<tc>, window_params = [{transform_indices = @transform_0, window_bounds = array<i64: 1, 8, 32>}, {pipeline_mode = #tpu.pipeline_mode<synchronous>, transform_indices = @transform_1, window_bounds = array<i64: 32, 160>}, {pipeline_mode = #tpu.pipeline_mode<synchronous>, transform_indices = @transform_2, window_bounds = array<i64: 1, 160>}, {transform_indices = @transform_3, window_bounds = array<i64: 1, 8, 32>}, {transform_indices = @transform_4, window_bounds = array<i64: 1, 8, 32>}, {transform_indices = @transform_5, window_bounds = array<i64: 1, 1, 8>}, {transform_indices = @transform_6, window_bounds = array<i64: 1, 8, 32>}]} {
    %c0 = arith.constant 0 : index
    %c0_0 = arith.constant 0 : index
    %c0_1 = arith.constant 0 : index
    %0 = vector.load %arg1[%c0, %c0_0, %c0_1] : memref<1x8x32xf32, #tpu.memory_space<vmem>>, vector<1x8x32xf32>
    %1 = vector.shape_cast %0 : vector<1x8x32xf32> to vector<8x32xf32>
    %c0_2 = arith.constant 0 : index
    %c0_3 = arith.constant 0 : index
    %2 = vector.load %arg2[%c0_2, %c0_3] : memref<32x160xf32, #tpu.memory_space<vmem>>, vector<32x160xf32>
    %cst = arith.constant dense<0.000000e+00> : vector<8x160xf32>
    %3 = tpu.matmul %1, %2, %cst {dimension_numbers = #tpu.dot_dimension_numbers<[1], [0], [0], [1], [0, 0, 1, 1], [], []>} : vector<8x32xf32>, vector<32x160xf32>, vector<8x160xf32> -> vector<8x160xf32>
    %c0_4 = arith.constant 0 : index
    %c0_5 = arith.constant 0 : index
    %4 = vector.load %arg3[%c0_4, %c0_5] : memref<1x160xf32, #tpu.memory_space<vmem>>, vector<1x160xf32>
    %5 = vector.broadcast %4 : vector<1x160xf32> to vector<8x160xf32>
    %6 = arith.addf %3, %5 : vector<8x160xf32>
    %c0_6 = arith.constant 0 : index
    %c0_7 = arith.constant 0 : index
    %c0_8 = arith.constant 0 : index
    %7 = vector.load %arg4[%c0_6, %c0_7, %c0_8] : memref<1x8x32xf32, #tpu.memory_space<vmem>>, vector<1x8x32xf32>
    %8 = vector.shape_cast %7 : vector<1x8x32xf32> to vector<8x32xf32>
    %c0_9 = arith.constant 0 : index
    %c0_10 = arith.constant 0 : index
    %c0_11 = arith.constant 0 : index
    %9 = vector.load %arg5[%c0_9, %c0_10, %c0_11] : memref<1x8x32xf32, #tpu.memory_space<vmem>>, vector<1x8x32xf32>
    %10 = vector.shape_cast %9 : vector<1x8x32xf32> to vector<8x32xf32>
    %11 = vector.extract_strided_slice %6 {offsets = [0, 0], sizes = [8, 32], strides = [1, 1]} : vector<8x160xf32> to vector<8x32xf32>
    %12 = vector.extract_strided_slice %6 {offsets = [0, 32], sizes = [8, 32], strides = [1, 1]} : vector<8x160xf32> to vector<8x32xf32>
    %13 = vector.extract_strided_slice %6 {offsets = [0, 64], sizes = [8, 32], strides = [1, 1]} : vector<8x160xf32> to vector<8x32xf32>
    %14 = vector.extract_strided_slice %6 {offsets = [0, 96], sizes = [8, 32], strides = [1, 1]} : vector<8x160xf32> to vector<8x32xf32>
    %15 = vector.extract_strided_slice %6 {offsets = [0, 128], sizes = [8, 32], strides = [1, 1]} : vector<8x160xf32> to vector<8x32xf32>
    %16 = arith.mulf %11, %8 : vector<8x32xf32>
    %17 = arith.mulf %12, %10 : vector<8x32xf32>
    %18 = arith.addf %16, %17 : vector<8x32xf32>
    %19 = arith.mulf %13, %8 : vector<8x32xf32>
    %20 = arith.mulf %14, %10 : vector<8x32xf32>
    %21 = arith.addf %19, %20 : vector<8x32xf32>
    %c0_12 = arith.constant 0 : index
    %c0_13 = arith.constant 0 : index
    %c0_14 = arith.constant 0 : index
    %22 = vector.load %arg6[%c0_12, %c0_13, %c0_14] : memref<1x1x8xf32, #tpu.memory_space<vmem>>, vector<1x1x8xf32>
    %23 = vector.shape_cast %22 : vector<1x1x8xf32> to vector<1x8xf32>
    %24 = vector.extract_strided_slice %18 {offsets = [0, 0], sizes = [8, 8], strides = [1, 1]} : vector<8x32xf32> to vector<8x8xf32>
    %25 = vector.extract_strided_slice %21 {offsets = [0, 0], sizes = [8, 8], strides = [1, 1]} : vector<8x32xf32> to vector<8x8xf32>
    %cst_15 = arith.constant dense<0.000000e+00> : vector<8x8xf32>
    %26 = tpu.matmul %24, %25, %cst_15 {dimension_numbers = #tpu.dot_dimension_numbers<[1], [1], [0], [0], [0, 0, 1, 0], [], []>} : vector<8x8xf32>, vector<8x8xf32>, vector<8x8xf32> -> vector<8x8xf32>
    %cst_16 = arith.constant 0.353553385 : f32
    %27 = vector.broadcast %cst_16 : f32 to vector<8x8xf32>
    %28 = arith.mulf %26, %27 : vector<8x8xf32>
    %29 = vector.broadcast %23 : vector<1x8xf32> to vector<8x8xf32>
    %30 = arith.addf %28, %29 : vector<8x8xf32>
    %cst_17 = arith.constant dense<0xFF800000> : vector<8xf32>
    %31 = vector.multi_reduction <maximumf>, %30, %cst_17 [1] : vector<8x8xf32> to vector<8xf32>
    %32 = vector.shape_cast %31 : vector<8xf32> to vector<8x1xf32>
    %33 = vector.broadcast %32 : vector<8x1xf32> to vector<8x8xf32>
    %34 = arith.subf %30, %33 : vector<8x8xf32>
    %35 = math.exp %34 : vector<8x8xf32>
    %cst_18 = arith.constant dense<0.000000e+00> : vector<8xf32>
    %36 = vector.multi_reduction <add>, %35, %cst_18 [1] : vector<8x8xf32> to vector<8xf32>
    %37 = vector.shape_cast %36 : vector<8xf32> to vector<8x1xf32>
    %38 = tpu.reciprocal %37 {approx = true} : vector<8x1xf32> -> vector<8x1xf32>
    %39 = vector.broadcast %38 : vector<8x1xf32> to vector<8x8xf32>
    %40 = arith.mulf %35, %39 : vector<8x8xf32>
    %41 = vector.extract_strided_slice %15 {offsets = [0, 0], sizes = [8, 8], strides = [1, 1]} : vector<8x32xf32> to vector<8x8xf32>
    %cst_19 = arith.constant dense<0.000000e+00> : vector<8x8xf32>
    %42 = tpu.matmul %40, %41, %cst_19 {dimension_numbers = #tpu.dot_dimension_numbers<[1], [0], [0], [1], [0, 0, 1, 1], [], []>} : vector<8x8xf32>, vector<8x8xf32>, vector<8x8xf32> -> vector<8x8xf32>
    %43 = vector.extract_strided_slice %18 {offsets = [0, 8], sizes = [8, 8], strides = [1, 1]} : vector<8x32xf32> to vector<8x8xf32>
    %44 = vector.extract_strided_slice %21 {offsets = [0, 8], sizes = [8, 8], strides = [1, 1]} : vector<8x32xf32> to vector<8x8xf32>
    %cst_20 = arith.constant dense<0.000000e+00> : vector<8x8xf32>
    %45 = tpu.matmul %43, %44, %cst_20 {dimension_numbers = #tpu.dot_dimension_numbers<[1], [1], [0], [0], [0, 0, 1, 0], [], []>} : vector<8x8xf32>, vector<8x8xf32>, vector<8x8xf32> -> vector<8x8xf32>
    %cst_21 = arith.constant 0.353553385 : f32
    %46 = vector.broadcast %cst_21 : f32 to vector<8x8xf32>
    %47 = arith.mulf %45, %46 : vector<8x8xf32>
    %48 = vector.broadcast %23 : vector<1x8xf32> to vector<8x8xf32>
    %49 = arith.addf %47, %48 : vector<8x8xf32>
    %cst_22 = arith.constant dense<0xFF800000> : vector<8xf32>
    %50 = vector.multi_reduction <maximumf>, %49, %cst_22 [1] : vector<8x8xf32> to vector<8xf32>
    %51 = vector.shape_cast %50 : vector<8xf32> to vector<8x1xf32>
    %52 = vector.broadcast %51 : vector<8x1xf32> to vector<8x8xf32>
    %53 = arith.subf %49, %52 : vector<8x8xf32>
    %54 = math.exp %53 : vector<8x8xf32>
    %cst_23 = arith.constant dense<0.000000e+00> : vector<8xf32>
    %55 = vector.multi_reduction <add>, %54, %cst_23 [1] : vector<8x8xf32> to vector<8xf32>
    %56 = vector.shape_cast %55 : vector<8xf32> to vector<8x1xf32>
    %57 = tpu.reciprocal %56 {approx = true} : vector<8x1xf32> -> vector<8x1xf32>
    %58 = vector.broadcast %57 : vector<8x1xf32> to vector<8x8xf32>
    %59 = arith.mulf %54, %58 : vector<8x8xf32>
    %60 = vector.extract_strided_slice %15 {offsets = [0, 8], sizes = [8, 8], strides = [1, 1]} : vector<8x32xf32> to vector<8x8xf32>
    %cst_24 = arith.constant dense<0.000000e+00> : vector<8x8xf32>
    %61 = tpu.matmul %59, %60, %cst_24 {dimension_numbers = #tpu.dot_dimension_numbers<[1], [0], [0], [1], [0, 0, 1, 1], [], []>} : vector<8x8xf32>, vector<8x8xf32>, vector<8x8xf32> -> vector<8x8xf32>
    %62 = vector.extract_strided_slice %18 {offsets = [0, 16], sizes = [8, 8], strides = [1, 1]} : vector<8x32xf32> to vector<8x8xf32>
    %63 = vector.extract_strided_slice %21 {offsets = [0, 16], sizes = [8, 8], strides = [1, 1]} : vector<8x32xf32> to vector<8x8xf32>
    %cst_25 = arith.constant dense<0.000000e+00> : vector<8x8xf32>
    %64 = tpu.matmul %62, %63, %cst_25 {dimension_numbers = #tpu.dot_dimension_numbers<[1], [1], [0], [0], [0, 0, 1, 0], [], []>} : vector<8x8xf32>, vector<8x8xf32>, vector<8x8xf32> -> vector<8x8xf32>
    %cst_26 = arith.constant 0.353553385 : f32
    %65 = vector.broadcast %cst_26 : f32 to vector<8x8xf32>
    %66 = arith.mulf %64, %65 : vector<8x8xf32>
    %67 = vector.broadcast %23 : vector<1x8xf32> to vector<8x8xf32>
    %68 = arith.addf %66, %67 : vector<8x8xf32>
    %cst_27 = arith.constant dense<0xFF800000> : vector<8xf32>
    %69 = vector.multi_reduction <maximumf>, %68, %cst_27 [1] : vector<8x8xf32> to vector<8xf32>
    %70 = vector.shape_cast %69 : vector<8xf32> to vector<8x1xf32>
    %71 = vector.broadcast %70 : vector<8x1xf32> to vector<8x8xf32>
    %72 = arith.subf %68, %71 : vector<8x8xf32>
    %73 = math.exp %72 : vector<8x8xf32>
    %cst_28 = arith.constant dense<0.000000e+00> : vector<8xf32>
    %74 = vector.multi_reduction <add>, %73, %cst_28 [1] : vector<8x8xf32> to vector<8xf32>
    %75 = vector.shape_cast %74 : vector<8xf32> to vector<8x1xf32>
    %76 = tpu.reciprocal %75 {approx = true} : vector<8x1xf32> -> vector<8x1xf32>
    %77 = vector.broadcast %76 : vector<8x1xf32> to vector<8x8xf32>
    %78 = arith.mulf %73, %77 : vector<8x8xf32>
    %79 = vector.extract_strided_slice %15 {offsets = [0, 16], sizes = [8, 8], strides = [1, 1]} : vector<8x32xf32> to vector<8x8xf32>
    %cst_29 = arith.constant dense<0.000000e+00> : vector<8x8xf32>
    %80 = tpu.matmul %78, %79, %cst_29 {dimension_numbers = #tpu.dot_dimension_numbers<[1], [0], [0], [1], [0, 0, 1, 1], [], []>} : vector<8x8xf32>, vector<8x8xf32>, vector<8x8xf32> -> vector<8x8xf32>
    %81 = vector.extract_strided_slice %18 {offsets = [0, 24], sizes = [8, 8], strides = [1, 1]} : vector<8x32xf32> to vector<8x8xf32>
    %82 = vector.extract_strided_slice %21 {offsets = [0, 24], sizes = [8, 8], strides = [1, 1]} : vector<8x32xf32> to vector<8x8xf32>
    %cst_30 = arith.constant dense<0.000000e+00> : vector<8x8xf32>
    %83 = tpu.matmul %81, %82, %cst_30 {dimension_numbers = #tpu.dot_dimension_numbers<[1], [1], [0], [0], [0, 0, 1, 0], [], []>} : vector<8x8xf32>, vector<8x8xf32>, vector<8x8xf32> -> vector<8x8xf32>
    %cst_31 = arith.constant 0.353553385 : f32
    %84 = vector.broadcast %cst_31 : f32 to vector<8x8xf32>
    %85 = arith.mulf %83, %84 : vector<8x8xf32>
    %86 = vector.broadcast %23 : vector<1x8xf32> to vector<8x8xf32>
    %87 = arith.addf %85, %86 : vector<8x8xf32>
    %cst_32 = arith.constant dense<0xFF800000> : vector<8xf32>
    %88 = vector.multi_reduction <maximumf>, %87, %cst_32 [1] : vector<8x8xf32> to vector<8xf32>
    %89 = vector.shape_cast %88 : vector<8xf32> to vector<8x1xf32>
    %90 = vector.broadcast %89 : vector<8x1xf32> to vector<8x8xf32>
    %91 = arith.subf %87, %90 : vector<8x8xf32>
    %92 = math.exp %91 : vector<8x8xf32>
    %cst_33 = arith.constant dense<0.000000e+00> : vector<8xf32>
    %93 = vector.multi_reduction <add>, %92, %cst_33 [1] : vector<8x8xf32> to vector<8xf32>
    %94 = vector.shape_cast %93 : vector<8xf32> to vector<8x1xf32>
    %95 = tpu.reciprocal %94 {approx = true} : vector<8x1xf32> -> vector<8x1xf32>
    %96 = vector.broadcast %95 : vector<8x1xf32> to vector<8x8xf32>
    %97 = arith.mulf %92, %96 : vector<8x8xf32>
    %98 = vector.extract_strided_slice %15 {offsets = [0, 24], sizes = [8, 8], strides = [1, 1]} : vector<8x32xf32> to vector<8x8xf32>
    %cst_34 = arith.constant dense<0.000000e+00> : vector<8x8xf32>
    %99 = tpu.matmul %97, %98, %cst_34 {dimension_numbers = #tpu.dot_dimension_numbers<[1], [0], [0], [1], [0, 0, 1, 1], [], []>} : vector<8x8xf32>, vector<8x8xf32>, vector<8x8xf32> -> vector<8x8xf32>
    %100 = tpu.concatenate %42, %61, %80, %99 in 1 : vector<8x8xf32>, vector<8x8xf32>, vector<8x8xf32>, vector<8x8xf32> -> vector<8x32xf32>
    %c0_35 = arith.constant 0 : index
    %c0_36 = arith.constant 0 : index
    %c0_37 = arith.constant 0 : index
    %101 = vector.load %arg7[%c0_35, %c0_36, %c0_37] : memref<1x8x32xf32, #tpu.memory_space<vmem>>, vector<1x8x32xf32>
    %102 = vector.shape_cast %101 : vector<1x8x32xf32> to vector<8x32xf32>
    %103 = vector.shape_cast %100 : vector<8x32xf32> to vector<1x8x32xf32>
    tpu.vector_store %arg7[%c0_35, %c0_36, %c0_37], %103 {strides = array<i32>} : memref<1x8x32xf32, #tpu.memory_space<vmem>>, vector<1x8x32xf32>,
    return
  }
  func.func @transform_0(%arg0: i32) -> (i32, i32, i32) {
    %c0_i32 = arith.constant 0 : i32
    %c0_i32_0 = arith.constant 0 : i32
    %c0_i32_1 = arith.constant 0 : i32
    return %arg0, %c0_i32, %c0_i32_0 : i32, i32, i32
  }
  func.func @transform_1(%arg0: i32) -> (i32, i32) {
    %c0_i32 = arith.constant 0 : i32
    %c0_i32_0 = arith.constant 0 : i32
    %c0_i32_1 = arith.constant 0 : i32
    return %c0_i32, %c0_i32_0 : i32, i32
  }
  func.func @transform_2(%arg0: i32) -> (i32, i32) {
    %c0_i32 = arith.constant 0 : i32
    %c0_i32_0 = arith.constant 0 : i32
    %c0_i32_1 = arith.constant 0 : i32
    return %c0_i32, %c0_i32_0 : i32, i32
  }
  func.func @transform_3(%arg0: i32) -> (i32, i32, i32) {
    %c0_i32 = arith.constant 0 : i32
    %c0_i32_0 = arith.constant 0 : i32
    %c0_i32_1 = arith.constant 0 : i32
    return %arg0, %c0_i32, %c0_i32_0 : i32, i32, i32
  }
  func.func @transform_4(%arg0: i32) -> (i32, i32, i32) {
    %c0_i32 = arith.constant 0 : i32
    %c0_i32_0 = arith.constant 0 : i32
    %c0_i32_1 = arith.constant 0 : i32
    return %arg0, %c0_i32, %c0_i32_0 : i32, i32, i32
  }
  func.func @transform_5(%arg0: i32) -> (i32, i32, i32) {
    %c0_i32 = arith.constant 0 : i32
    %c0_i32_0 = arith.constant 0 : i32
    %c0_i32_1 = arith.constant 0 : i32
    return %arg0, %c0_i32, %c0_i32_0 : i32, i32, i32
  }
  func.func @transform_6(%arg0: i32) -> (i32, i32, i32) {
    %c0_i32 = arith.constant 0 : i32
    %c0_i32_0 = arith.constant 0 : i32
    %c0_i32_1 = arith.constant 0 : i32
    return %arg0, %c0_i32, %c0_i32_0 : i32, i32, i32
  }
}

</mosaic_0001>

<llo_original>
// kernel: tpu_custom_call.1
$region0: #{tpu_custom_call.1}
  #allocation0 [shape = 'u32[]', space=smem, size = 0x4, offset = 0x4, fixed_abs, tag = 'smem constant byte address 0x4 - core index']
  #allocation1 [shape = 'u32[144,128]{1,0:T(1,128)}', space=vmem, size = 0x12000, scoped, tag = 'internal scratch']
  %s0 = inlined_call_operand.hbm [shape: f32[2,8,32], index: 0, kind: input, shape index: {}]
  %s1 = inlined_call_operand.hbm [shape: f32[32,160], index: 1, kind: input, shape index: {}]
  %s2 = inlined_call_operand.vmem [shape: f32[1,160], index: 2, kind: input, shape index: {}]
  %s3 = inlined_call_operand.hbm [shape: f32[2,8,32], index: 3, kind: input, shape index: {}]
  %s4 = inlined_call_operand.hbm [shape: f32[2,8,32], index: 4, kind: input, shape index: {}]
  %s5 = inlined_call_operand.vmem [shape: f32[2,1,8], index: 5, kind: input, shape index: {}]
  %s6 = inlined_call_operand.hbm [shape: f32[2,8,32], index: 6, kind: output, shape index: {}]
  %s7 = sld [smem:[#allocation0]]
  $region73: #{tpu_custom_call.1} parent=0
    _
  %s9 = ssub.s32 1, %s7
  %s10 = scalar_select 0, %s9, %s7
  $region1: #{tpu_custom_call.1} parent=0
    #allocation2 [shape = 'u8[8192]{0}', space=vmem, size = 0x2000, scoped, tag = 'input window, operand 0']
    #allocation3 [shape = 's32[2]{0}', space=sflag, size = 0x8, scoped, tag = 'scoped memory for tpu_custom_call.1']
    #allocation4 [shape = 's32[2]{0}', space=sflag, size = 0x8, scoped, tag = 'scoped memory for tpu_custom_call.1']
    #allocation5 [shape = 'u8[32768]{0}', space=vmem, size = 0x8000, scoped, tag = 'input window, operand 1, single buffered']
    #allocation6 [shape = 's32[1]{0}', space=sflag, size = 0x4, scoped, tag = 'scoped memory for tpu_custom_call.1']
    #allocation7 [shape = 'u8[8192]{0}', space=vmem, size = 0x2000, scoped, tag = 'input window, operand 3']
    #allocation8 [shape = 'u8[8192]{0}', space=vmem, size = 0x2000, scoped, tag = 'input window, operand 4']
    #allocation9 [shape = 'u8[8192]{0}', space=vmem, size = 0x2000, scoped, tag = 'output window, operand 0']
    %11 = vsyncpa [#allocation3], 0
    %s12 = scalar_lea.sflag [#allocation3], 1
    %13 = vsyncpa %s12, 0
    %14 = vsyncpa [#allocation6], 0
    %15 = vsyncpa [#allocation4], 0
    %s16 = scalar_lea.sflag [#allocation4], 1
    %17 = vsyncpa %s16, 0
    loop: start=0, step=1, limit=4
    $region2: #{tpu_custom_call.1} parent=1 // loop_pre_header
      _
    $region3: #{tpu_custom_call.1} parent=1 // loop_header
      %s19 = sphi 0, %s23
      %p20 = scmp.ge.s32.totalorder %s19, 4
      %s29 = sphi 0, %s31
      %s32 = sphi 0, %s29
      %s33 = sphi 0, %s32
      %s49 = sphi 0, %s33
      %s53 = sphi 0, %s53
      %s55 = sphi 0, %s53
      %s56 = sphi 0, %s55
      %s70 = sphi 0, %s56
      %s74 = sphi 0, %s74
      %s76 = sphi 0, %s74
      %s77 = sphi 0, %s76
      %s91 = sphi 0, %s77
      %s97 = sphi 0, %s99
      %s100 = sphi 0, %s97
      %s101 = sphi 0, %s100
      %s117 = sphi 0, %s101
      %s123 = sphi 0, %s125
      %s126 = sphi 0, %s123
      %s127 = sphi 0, %s126
      %s143 = sphi 0, %s127
      %s149 = sphi 0, %s151
      %s152 = sphi 0, %s149
      %s153 = sphi 0, %s152
      %s169 = sphi 0, %s153
      %s175 = sphi 0, %s177
      %s178 = sphi 0, %s175
      %s179 = sphi 0, %s178
      %s195 = sphi 0, %s179
    $region4: #{tpu_custom_call.1} parent=1 // loop_header_branch
      %22 = sbr.rel (%p20) target = $region8
    $region5: #{tpu_custom_call.1} parent=1 // loop_body
      %s24 = ssub.s32 %s19, 1
      %s25 = ssub.s32 %s19, 2
      %s26 = sadd.s32 %s19, 1
      %s27 = ssub.s32 %s19, %s26
      %p28 = scmp.eq.s32.totalorder %s27, 0
      %s30 = sadd.s32 %s29, 1
      %s31 = scalar_select %p28, %s29, %s30
      %p34 = pneg %p28
      %p35 = scmp.eq.s32.totalorder %s19, 1
      %p36 = por %p34, %p35
      %p37 = scmp.ne.s32.totalorder %s29, %s32
      %p38 = scmp.eq.s32.totalorder %s19, 0
      %p39 = por %p37, %p38
      %p40 = scmp.ne.s32.totalorder %s29, %s32
      %p41 = scmp.eq.s32.totalorder %s24, 1
      %p42 = por %p40, %p41
      %p43 = scmp.ne.s32.totalorder %s32, %s33
      %p44 = scmp.eq.s32.totalorder %s24, 0
      %p45 = por %p43, %p44
      %p46 = scmp.ne.s32.totalorder %s32, %s33
      %p47 = scmp.eq.s32.totalorder %s25, 1
      %p48 = por %p46, %p47
      %p50 = scmp.ne.s32.totalorder %s33, %s49
      %p51 = scmp.eq.s32.totalorder %s25, 0
      %p52 = por %p50, %p51
      %s54 = sadd.s32 %s53, 1
      %p57 = scmp.eq.s32.totalorder %s19, 1
      %p58 = scmp.ne.s32.totalorder %s53, %s55
      %p59 = scmp.eq.s32.totalorder %s19, 0
      %p60 = por %p58, %p59
      %p61 = scmp.ne.s32.totalorder %s53, %s55
      %p62 = scmp.eq.s32.totalorder %s24, 1
      %p63 = por %p61, %p62
      %p64 = scmp.ne.s32.totalorder %s55, %s56
      %p65 = scmp.eq.s32.totalorder %s24, 0
      %p66 = por %p64, %p65
      %p67 = scmp.ne.s32.totalorder %s55, %s56
      %p68 = scmp.eq.s32.totalorder %s25, 1
      %p69 = por %p67, %p68
      %p71 = scmp.ne.s32.totalorder %s56, %s70
      %p72 = scmp.eq.s32.totalorder %s25, 0
      %p73 = por %p71, %p72
      %s75 = sadd.s32 %s74, 1
      %p78 = scmp.eq.s32.totalorder %s19, 1
      %p79 = scmp.ne.s32.totalorder %s74, %s76
      %p80 = scmp.eq.s32.totalorder %s19, 0
      %p81 = por %p79, %p80
      %p82 = scmp.ne.s32.totalorder %s74, %s76
      %p83 = scmp.eq.s32.totalorder %s24, 1
      %p84 = por %p82, %p83
      %p85 = scmp.ne.s32.totalorder %s76, %s77
      %p86 = scmp.eq.s32.totalorder %s24, 0
      %p87 = por %p85, %p86
      %p88 = scmp.ne.s32.totalorder %s76, %s77
      %p89 = scmp.eq.s32.totalorder %s25, 1
      %p90 = por %p88, %p89
      %p92 = scmp.ne.s32.totalorder %s77, %s91
      %p93 = scmp.eq.s32.totalorder %s25, 0
      %p94 = por %p92, %p93
      %s95 = ssub.s32 %s19, %s26
      %p96 = scmp.eq.s32.totalorder %s95, 0
      %s98 = sadd.s32 %s97, 1
      %s99 = scalar_select %p96, %s97, %s98
      %p102 = pneg %p96
      %p103 = scmp.eq.s32.totalorder %s19, 1
      %p104 = por %p102, %p103
      %p105 = scmp.ne.s32.totalorder %s97, %s100
      %p106 = scmp.eq.s32.totalorder %s19, 0
      %p107 = por %p105, %p106
      %p108 = scmp.ne.s32.totalorder %s97, %s100
      %p109 = scmp.eq.s32.totalorder %s24, 1
      %p110 = por %p108, %p109
      %p111 = scmp.ne.s32.totalorder %s100, %s101
      %p112 = scmp.eq.s32.totalorder %s24, 0
      %p113 = por %p111, %p112
      %p114 = scmp.ne.s32.totalorder %s100, %s101
      %p115 = scmp.eq.s32.totalorder %s25, 1
      %p116 = por %p114, %p115
      %p118 = scmp.ne.s32.totalorder %s101, %s117
      %p119 = scmp.eq.s32.totalorder %s25, 0
      %p120 = por %p118, %p119
      %s121 = ssub.s32 %s19, %s26
      %p122 = scmp.eq.s32.totalorder %s121, 0
      %s124 = sadd.s32 %s123, 1
      %s125 = scalar_select %p122, %s123, %s124
      %p128 = pneg %p122
      %p129 = scmp.eq.s32.totalorder %s19, 1
      %p130 = por %p128, %p129
      %p131 = scmp.ne.s32.totalorder %s123, %s126
      %p132 = scmp.eq.s32.totalorder %s19, 0
      %p133 = por %p131, %p132
      %p134 = scmp.ne.s32.totalorder %s123, %s126
      %p135 = scmp.eq.s32.totalorder %s24, 1
      %p136 = por %p134, %p135
      %p137 = scmp.ne.s32.totalorder %s126, %s127
      %p138 = scmp.eq.s32.totalorder %s24, 0
      %p139 = por %p137, %p138
      %p140 = scmp.ne.s32.totalorder %s126, %s127
      %p141 = scmp.eq.s32.totalorder %s25, 1
      %p142 = por %p140, %p141
      %p144 = scmp.ne.s32.totalorder %s127, %s143
      %p145 = scmp.eq.s32.totalorder %s25, 0
      %p146 = por %p144, %p145
      %s147 = ssub.s32 %s19, %s26
      %p148 = scmp.eq.s32.totalorder %s147, 0
      %s150 = sadd.s32 %s149, 1
      %s151 = scalar_select %p148, %s149, %s150
      %p154 = pneg %p148
      %p155 = scmp.eq.s32.totalorder %s19, 1
      %p156 = por %p154, %p155
      %p157 = scmp.ne.s32.totalorder %s149, %s152
      %p158 = scmp.eq.s32.totalorder %s19, 0
      %p159 = por %p157, %p158
      %p160 = scmp.ne.s32.totalorder %s149, %s152
      %p161 = scmp.eq.s32.totalorder %s24, 1
      %p162 = por %p160, %p161
      %p163 = scmp.ne.s32.totalorder %s152, %s153
      %p164 = scmp.eq.s32.totalorder %s24, 0
      %p165 = por %p163, %p164
      %p166 = scmp.ne.s32.totalorder %s152, %s153
      %p167 = scmp.eq.s32.totalorder %s25, 1
      %p168 = por %p166, %p167
      %p170 = scmp.ne.s32.totalorder %s153, %s169
      %p171 = scmp.eq.s32.totalorder %s25, 0
      %p172 = por %p170, %p171
      %s173 = ssub.s32 %s19, %s26
      %p174 = scmp.eq.s32.totalorder %s173, 0
      %s176 = sadd.s32 %s175, 1
      %s177 = scalar_select %p174, %s175, %s176
      %p180 = pneg %p174
      %p181 = scmp.eq.s32.totalorder %s19, 1
      %p182 = por %p180, %p181
      %p183 = scmp.ne.s32.totalorder %s175, %s178
      %p184 = scmp.eq.s32.totalorder %s19, 0
      %p185 = por %p183, %p184
      %p186 = scmp.ne.s32.totalorder %s175, %s178
      %p187 = scmp.eq.s32.totalorder %s24, 1
      %p188 = por %p186, %p187
      %p189 = scmp.ne.s32.totalorder %s178, %s179
      %p190 = scmp.eq.s32.totalorder %s24, 0
      %p191 = por %p189, %p190
      %p192 = scmp.ne.s32.totalorder %s178, %s179
      %p193 = scmp.eq.s32.totalorder %s25, 1
      %p194 = por %p192, %p193
      %p196 = scmp.ne.s32.totalorder %s179, %s195
      %p197 = scmp.eq.s32.totalorder %s25, 0
      %p198 = por %p196, %p197
      %p199 = scmp.le.s32.totalorder 1, %s19
      %p200 = scmp.lt.s32.totalorder %s19, 3
      %p201 = pnand %p199, %p200
      %p202 = pneg %p201
      // Predicated region
      $region9: #{tpu_custom_call.1} parent=5 // pred_check
        _
      $region10: #{tpu_custom_call.1} parent=5 // pred_check_branch
        %204 = sbr.rel (%p201) target = $region12
      $region11: #{tpu_custom_call.1} parent=5 // pred_region
        %s205 = ssub.s32 %s19, 1
        // Predicated region
        $region13: #{tpu_custom_call.1} parent=11 // pred_check
          %p206 = pneg %p66
        $region14: #{tpu_custom_call.1} parent=11 // pred_check_branch
          %208 = sbr.rel (%p206) target = $region16
        $region15: #{tpu_custom_call.1} parent=11 // pred_region
          %s210 = ssub.s32 1024, 1024
          %211 = vsyncadd [#allocation6], %s210
          %s212 = sshll.u32 [#allocation5], 4
          %s213 = int_to_ptr.vmem [resolvable:$true] %s212
          %218 = dma.hbm_to_vmem [thread:$0]  %s1, 1024, %s213, [#allocation6], 256, 256, 16
        $region16: #{tpu_custom_call.1} parent=11 // pred_fallthru
          _
        // Predicated region
        $region17: #{tpu_custom_call.1} parent=11 // pred_check
          %p219 = pneg %p87
        $region18: #{tpu_custom_call.1} parent=11 // pred_check_branch
          %221 = sbr.rel (%p219) target = $region20
        $region19: #{tpu_custom_call.1} parent=11 // pred_region
          _
        $region20: #{tpu_custom_call.1} parent=11 // pred_fallthru
          _
      $region12: #{tpu_custom_call.1} parent=5 // pred_fallthru
        _
      %p222 = scmp.lt.s32.totalorder %s19, 2
      // Predicated region
      $region21: #{tpu_custom_call.1} parent=5 // pred_check
        %p223 = pneg %p222
      $region22: #{tpu_custom_call.1} parent=5 // pred_check_branch
        %225 = sbr.rel (%p223) target = $region24
      $region23: #{tpu_custom_call.1} parent=5 // pred_region
        // Predicated region
        $region25: #{tpu_custom_call.1} parent=23 // pred_check
          %p226 = pneg %p39
        $region26: #{tpu_custom_call.1} parent=23 // pred_check_branch
          %228 = sbr.rel (%p226) target = $region28
        $region27: #{tpu_custom_call.1} parent=23 // pred_region
          %s229 = sand.u32 %s19, 1
          %s230 = scalar_lea.sflag [#allocation3], %s229
          %s231 = sand.u32 %s29, 1
          %s232 = smul.addr %s231, 8
          %s233 = scalar_lea.vmem [#allocation2], %s232
          %s235 = ssub.s32 128, 128
          %236 = vsyncadd %s230, %s235
          %s237 = smul.addr %s19, 128
          %s238 = scalar_lea.hbm %s0, %s237
          %s240 = sshll.u32 %s233, 4
          %s241 = int_to_ptr.vmem [resolvable:$true] %s240
          %243 = dma.hbm_to_vmem [thread:$0]  %s238, 128, %s241, %s230
        $region28: #{tpu_custom_call.1} parent=23 // pred_fallthru
          _
        // Predicated region
        $region29: #{tpu_custom_call.1} parent=23 // pred_check
          %p244 = pneg %p107
        $region30: #{tpu_custom_call.1} parent=23 // pred_check_branch
          %246 = sbr.rel (%p244) target = $region32
        $region31: #{tpu_custom_call.1} parent=23 // pred_region
          %s247 = sand.u32 %s19, 1
          %s248 = scalar_lea.sflag [#allocation3], %s247
          %s249 = sand.u32 %s97, 1
          %s250 = smul.addr %s249, 8
          %s251 = scalar_lea.vmem [#allocation7], %s250
          %s253 = ssub.s32 128, 128
          %254 = vsyncadd %s248, %s253
          %s255 = smul.addr %s19, 128
          %s256 = scalar_lea.hbm %s3, %s255
          %s258 = sshll.u32 %s251, 4
          %s259 = int_to_ptr.vmem [resolvable:$true] %s258
          %261 = dma.hbm_to_vmem [thread:$0]  %s256, 128, %s259, %s248
        $region32: #{tpu_custom_call.1} parent=23 // pred_fallthru
          _
        // Predicated region
        $region33: #{tpu_custom_call.1} parent=23 // pred_check
          %p262 = pneg %p133
        $region34: #{tpu_custom_call.1} parent=23 // pred_check_branch
          %264 = sbr.rel (%p262) target = $region36
        $region35: #{tpu_custom_call.1} parent=23 // pred_region
          %s265 = sand.u32 %s19, 1
          %s266 = scalar_lea.sflag [#allocation3], %s265
          %s267 = sand.u32 %s123, 1
          %s268 = smul.addr %s267, 8
          %s269 = scalar_lea.vmem [#allocation8], %s268
          %s271 = ssub.s32 128, 128
          %272 = vsyncadd %s266, %s271
          %s273 = smul.addr %s19, 128
          %s274 = scalar_lea.hbm %s4, %s273
          %s276 = sshll.u32 %s269, 4
          %s277 = int_to_ptr.vmem [resolvable:$true] %s276
          %279 = dma.hbm_to_vmem [thread:$0]  %s274, 128, %s277, %s266
        $region36: #{tpu_custom_call.1} parent=23 // pred_fallthru
          _
        // Predicated region
        $region37: #{tpu_custom_call.1} parent=23 // pred_check
          %p280 = pneg %p159
        $region38: #{tpu_custom_call.1} parent=23 // pred_check_branch
          %282 = sbr.rel (%p280) target = $region40
        $region39: #{tpu_custom_call.1} parent=23 // pred_region
          %p283 = scmp.lt.s32.totalorder %s19, 1
          %s284 = scalar_select %p283, %s19, 1
          %s285 = scalar_lea.vmem %s5, %s284
        $region40: #{tpu_custom_call.1} parent=23 // pred_fallthru
          _
      $region24: #{tpu_custom_call.1} parent=5 // pred_fallthru
        _
      %p286 = scmp.le.s32.totalorder 1, %s19
      %p287 = scmp.lt.s32.totalorder %s19, 3
      %p288 = pnand %p286, %p287
      %p289 = pneg %p288
      // Predicated region
      $region41: #{tpu_custom_call.1} parent=5 // pred_check
        _
      $region42: #{tpu_custom_call.1} parent=5 // pred_check_branch
        %291 = sbr.rel (%p288) target = $region44
      $region43: #{tpu_custom_call.1} parent=5 // pred_region
        %s292 = ssub.s32 %s19, 1
        %s293 = sand.u32 %s24, 1
        %s294 = scalar_lea.sflag [#allocation3], %s293
        %s295 = sand.u32 %s32, 1
        %s296 = smul.addr %s295, 8
        %s297 = scalar_lea.vmem [#allocation2], %s296
        // Predicated region
        $region45: #{tpu_custom_call.1} parent=43 // pred_check
          %p298 = pneg %p45
        $region46: #{tpu_custom_call.1} parent=43 // pred_check_branch
          %300 = sbr.rel (%p298) target = $region48
        $region47: #{tpu_custom_call.1} parent=43 // pred_region
          %301 = dma.done %s294, 128
        $region48: #{tpu_custom_call.1} parent=43 // pred_fallthru
          _
        // Predicated region
        $region49: #{tpu_custom_call.1} parent=43 // pred_check
          %p302 = pneg %p66
        $region50: #{tpu_custom_call.1} parent=43 // pred_check_branch
          %304 = sbr.rel (%p302) target = $region52
        $region51: #{tpu_custom_call.1} parent=43 // pred_region
          %305 = dma.done [#allocation6], 1024
        $region52: #{tpu_custom_call.1} parent=43 // pred_fallthru
          _
        %s306 = sand.u32 %s24, 1
        %s307 = scalar_lea.sflag [#allocation3], %s306
        %s308 = sand.u32 %s100, 1
        %s309 = smul.addr %s308, 8
        %s310 = scalar_lea.vmem [#allocation7], %s309
        // Predicated region
        $region53: #{tpu_custom_call.1} parent=43 // pred_check
          %p311 = pneg %p113
        $region54: #{tpu_custom_call.1} parent=43 // pred_check_branch
          %313 = sbr.rel (%p311) target = $region56
        $region55: #{tpu_custom_call.1} parent=43 // pred_region
          %314 = dma.done %s307, 128
        $region56: #{tpu_custom_call.1} parent=43 // pred_fallthru
          _
        %s315 = sand.u32 %s24, 1
        %s316 = scalar_lea.sflag [#allocation3], %s315
        %s317 = sand.u32 %s126, 1
        %s318 = smul.addr %s317, 8
        %s319 = scalar_lea.vmem [#allocation8], %s318
        // Predicated region
        $region57: #{tpu_custom_call.1} parent=43 // pred_check
          %p320 = pneg %p139
        $region58: #{tpu_custom_call.1} parent=43 // pred_check_branch
          %322 = sbr.rel (%p320) target = $region60
        $region59: #{tpu_custom_call.1} parent=43 // pred_region
          %323 = dma.done %s316, 128
        $region60: #{tpu_custom_call.1} parent=43 // pred_fallthru
          _
        %s324 = sand.u32 %s24, 1
        %s325 = scalar_lea.sflag [#allocation3], %s324
        %s326 = sand.u32 %s32, 1
        %s327 = smul.addr %s326, 8
        %s328 = scalar_lea.vmem [#allocation2], %s327
        %p329 = pneg %p45
        %p330 = pneg %p42
        %p331 = pneg %p66
        %p332 = pneg %p63
        %p333 = pneg %p87
        %p334 = pneg %p84
        %s335 = sand.u32 %s24, 1
        %s336 = scalar_lea.sflag [#allocation3], %s335
        %s337 = sand.u32 %s100, 1
        %s338 = smul.addr %s337, 8
        %s339 = scalar_lea.vmem [#allocation7], %s338
        %p340 = pneg %p113
        %p341 = pneg %p110
        %s342 = sand.u32 %s24, 1
        %s343 = scalar_lea.sflag [#allocation3], %s342
        %s344 = sand.u32 %s126, 1
        %s345 = smul.addr %s344, 8
        %s346 = scalar_lea.vmem [#allocation8], %s345
        %p347 = pneg %p139
        %p348 = pneg %p136
        %p349 = scmp.lt.s32.totalorder %s24, 1
        %s350 = scalar_select %p349, %s24, 1
        %s351 = scalar_lea.vmem %s5, %s350
        %p352 = pneg %p165
        %p353 = pneg %p162
        %p354 = pneg %p191
        %p355 = pneg %p188
        %s356 = sand.u32 %s178, 1
        %s357 = scalar_lea.sflag [#allocation4], %s356
        %s358 = sand.u32 %s178, 1
        %s359 = smul.addr %s358, 8
        %s360 = scalar_lea.vmem [#allocation9], %s359
        %p361 = scmp.lt.s32.totalorder %s24, 1
        %s362 = scalar_select %p361, %s24, 1
        %s363 = scalar_lea.vmem %s5, %s362
        %v364 = vld [vmem:[%s297] sm:$0xff]
        %v365 = vld [vmem:[#allocation5] sm:$0xff]
        %v366 = vld [vmem:[#allocation5 + $0x8] sm:$0xff]
        %v367 = vld [vmem:[#allocation5 + $0x10] sm:$0xff]
        %v368 = vld [vmem:[#allocation5 + $0x18] sm:$0xff]
        %v369 = vld [vmem:[#allocation5 + $0x20] sm:$0xff]
        %v370 = vld [vmem:[#allocation5 + $0x28] sm:$0xff]
        %v371 = vld [vmem:[#allocation5 + $0x30] sm:$0xff]
        %v372 = vld [vmem:[#allocation5 + $0x38] sm:$0xff]
        %v373 = vld [vmem:[%s2] sm:$0x3]
        %v375 = vlaneseq
        %v376 = vshrl.u32 %v375, 7
        %v377 = vsub.s32 0, %v376
        %v378 = vrot.slane %v373, %v377
        %v379 = vlaneseq
        %v380 = vshrl.u32 %v379, 7
        %v381 = vsub.s32 1, %v380
        %v382 = vrot.slane %v373, %v381
        %vm385 = vcmask 261120
        %v387 = vsel %vm385, %v364, 0
        %389 = vmatprep.subr.mxu0 0.0
        %390 = vmatpush1.msra.mxu0 0.0
        %391 = vmatprep.subr.mxu0 0.0
        %392 = vmatpush1.msra.mxu0 0.0
        %393 = vmatprep.subr.mxu0 0.0
        %394 = vmatpush1.msra.mxu0 0.0
        %395 = vmatprep.subr.mxu0 0.0
        %396 = vmatpush1.msra.mxu0 0.0
        %397 = vmatprep.subr.mxu0 0.0
        %398 = vmatpush1.msra.mxu0 0.0
        %399 = vmatprep.subr.mxu0 0.0
        %400 = vmatpush1.msra.mxu0 0.0
        %401 = vmatprep.subr.mxu0 0.0
        %402 = vmatpush1.msra.mxu0 0.0
        %403 = vmatprep.subr.mxu0 0.0
        %404 = vmatpush1.msra.mxu0 0.0
        %405 = vmatprep.subr.mxu0 0.0
        %406 = vmatpush1.msra.mxu0 0.0
        %407 = vmatprep.subr.mxu0 0.0
        %408 = vmatpush1.msra.mxu0 0.0
        %409 = vmatprep.subr.mxu0 0.0
        %410 = vmatpush1.msra.mxu0 0.0
        %411 = vmatprep.subr.mxu0 0.0
        %412 = vmatpush1.msra.mxu0 0.0
        %413 = vmatprep.subr.mxu0 %v372
        %414 = vmatpush1.msra.mxu0 %v371
        %415 = vmatprep.subr.mxu0 %v370
        %416 = vmatpush1.msra.mxu0 %v369
        %417 = vmatprep.subr.mxu0 %v368
        %418 = vmatpush1.msra.mxu0 %v367
        %419 = vmatprep.subr.mxu0 %v366
        %420 = vmatpush1.msra.mxu0 %v365
        %421 = vmatprep.subr.mxu0 0.0
        %422 = vmatpush2.msra.mxu0 0.0
        %423 = vmatprep.subr.mxu0 0.0
        %424 = vmatpush2.msra.mxu0 0.0
        %425 = vmatprep.subr.mxu0 0.0
        %426 = vmatpush2.msra.mxu0 0.0
        %427 = vmatprep.subr.mxu0 0.0
        %428 = vmatpush2.msra.mxu0 0.0
        %429 = vmatprep.subr.mxu0 0.0
        %430 = vmatpush2.msra.mxu0 0.0
        %431 = vmatprep.subr.mxu0 0.0
        %432 = vmatpush2.msra.mxu0 0.0
        %433 = vmatprep.subr.mxu0 0.0
        %434 = vmatpush2.msra.mxu0 0.0
        %435 = vmatprep.subr.mxu0 0.0
        %436 = vmatpush2.msra.mxu0 0.0
        %437 = vmatprep.subr.mxu0 0.0
        %438 = vmatpush2.msra.mxu0 0.0
        %439 = vmatprep.subr.mxu0 0.0
        %440 = vmatpush2.msra.mxu0 0.0
        %441 = vmatprep.subr.mxu0 0.0
        %442 = vmatpush2.msra.mxu0 0.0
        %443 = vmatprep.subr.mxu0 0.0
        %444 = vmatpush2.msra.mxu0 0.0
        %445 = vmatprep.subr.mxu0 0.0
        %446 = vmatpush2.msra.mxu0 0.0
        %447 = vmatprep.subr.mxu0 0.0
        %448 = vmatpush2.msra.mxu0 0.0
        %449 = vmatprep.subr.mxu0 0.0
        %450 = vmatpush2.msra.mxu0 0.0
        %451 = vmatprep.subr.mxu0 0.0
        %452 = vmatpush2.msra.mxu0 0.0
        %453 = vmatprep.mubr.f32.mxu0 0.0
        %454 = vmatmul.mubr.f32.gmra.mxu0 %v387
        %v455 = vpop.f32.mrf.mxu0
        %v456 = vadd.f32 %v378, %v455
        %v457 = vpop.f32.mrf.mxu0
        %v458 = vadd.f32 %v382, %v457
        %459 = vdwg.mxu0
        %v460 = vld [vmem:[%s310] sm:$0xff]
        %v461 = vld [vmem:[%s319] sm:$0xff]
        %v462 = vmul.f32 %v456, %v460
        %464 = vrot.lane.b32.xlu0 %v461, 32
        %v465 = vpop.permute.xlu0 %464
        %v467 = vmul.f32 %v456, %v465
        %469 = vrot.lane.b32.xlu0 %v467, 96
        %v470 = vpop.permute.xlu0 %469
        %v472 = vadd.f32 %v462, %v470
        %474 = vrot.lane.b32.xlu0 %v460, 64
        %v475 = vpop.permute.xlu0 %474
        %v477 = vmul.f32 %v456, %v475
        %478 = vrot.lane.b32.xlu0 %v461, 96
        %v479 = vpop.permute.xlu0 %478
        %v481 = vmul.f32 %v456, %v479
        %483 = vrot.lane.b32.xlu0 %v481, 96
        %v484 = vpop.permute.xlu0 %483
        %v486 = vadd.f32 %v477, %v484
        %v487 = vld [vmem:[%s363] sm:$0x1]
        %489 = vrot.lane.b32.xlu0 %v486, 64
        %v490 = vpop.permute.xlu0 %489
        %vm491 = vcmask 64512
        %v493 = vsel %vm491, %v472, 0
        %v495 = vsel %vm491, %v490, 0
        %497 = vmatprep.subr.mxu0 0.0
        %498 = vmatpush1.xpose.msra.mxu0 0.0
        %499 = vmatprep.subr.mxu0 0.0
        %500 = vmatpush1.xpose.msra.mxu0 0.0
        %501 = vmatprep.subr.mxu0 0.0
        %502 = vmatpush1.xpose.msra.mxu0 0.0
        %503 = vmatprep.subr.mxu0 0.0
        %504 = vmatpush1.xpose.msra.mxu0 0.0
        %505 = vmatprep.subr.mxu0 0.0
        %506 = vmatpush1.xpose.msra.mxu0 0.0
        %507 = vmatprep.subr.mxu0 0.0
        %508 = vmatpush1.xpose.msra.mxu0 0.0
        %509 = vmatprep.subr.mxu0 0.0
        %510 = vmatpush1.xpose.msra.mxu0 0.0
        %511 = vmatprep.subr.mxu0 0.0
        %512 = vmatpush1.xpose.msra.mxu0 0.0
        %513 = vmatprep.subr.mxu0 0.0
        %514 = vmatpush1.xpose.msra.mxu0 0.0
        %515 = vmatprep.subr.mxu0 0.0
        %516 = vmatpush1.xpose.msra.mxu0 0.0
        %517 = vmatprep.subr.mxu0 0.0
        %518 = vmatpush1.xpose.msra.mxu0 0.0
        %519 = vmatprep.subr.mxu0 0.0
        %520 = vmatpush1.xpose.msra.mxu0 0.0
        %521 = vmatprep.subr.mxu0 0.0
        %522 = vmatpush1.xpose.msra.mxu0 0.0
        %523 = vmatprep.subr.mxu0 0.0
        %524 = vmatpush1.xpose.msra.mxu0 0.0
        %525 = vmatprep.subr.mxu0 0.0
        %526 = vmatpush1.xpose.msra.mxu0 0.0
        %527 = vmatprep.subr.mxu0 0.0
        %528 = vmatpush1.xpose.msra.mxu0 %v495
        %529 = vmatprep.subr.mxu0 0.0
        %530 = vmatpush2.xpose.msra.mxu0 0.0
        %531 = vmatprep.subr.mxu0 0.0
        %532 = vmatpush2.xpose.msra.mxu0 0.0
        %533 = vmatprep.subr.mxu0 0.0
        %534 = vmatpush2.xpose.msra.mxu0 0.0
        %535 = vmatprep.subr.mxu0 0.0
        %536 = vmatpush2.xpose.msra.mxu0 0.0
        %537 = vmatprep.subr.mxu0 0.0
        %538 = vmatpush2.xpose.msra.mxu0 0.0
        %539 = vmatprep.subr.mxu0 0.0
        %540 = vmatpush2.xpose.msra.mxu0 0.0
        %541 = vmatprep.subr.mxu0 0.0
        %542 = vmatpush2.xpose.msra.mxu0 0.0
        %543 = vmatprep.subr.mxu0 0.0
        %544 = vmatpush2.xpose.msra.mxu0 0.0
        %545 = vmatprep.subr.mxu0 0.0
        %546 = vmatpush2.xpose.msra.mxu0 0.0
        %547 = vmatprep.subr.mxu0 0.0
        %548 = vmatpush2.xpose.msra.mxu0 0.0
        %549 = vmatprep.subr.mxu0 0.0
        %550 = vmatpush2.xpose.msra.mxu0 0.0
        %551 = vmatprep.subr.mxu0 0.0
        %552 = vmatpush2.xpose.msra.mxu0 0.0
        %553 = vmatprep.subr.mxu0 0.0
        %554 = vmatpush2.xpose.msra.mxu0 0.0
        %555 = vmatprep.subr.mxu0 0.0
        %556 = vmatpush2.xpose.msra.mxu0 0.0
        %557 = vmatprep.subr.mxu0 0.0
        %558 = vmatpush2.xpose.msra.mxu0 0.0
        %559 = vmatprep.subr.mxu0 0.0
        %560 = vmatpush2.xpose.msra.mxu0 0.0
        %561 = vmatprep.mubr.f32.mxu0 0.0
        %562 = vmatmul.mubr.f32.gmra.mxu0 %v493
        %v563 = vpop.f32.mrf.mxu0
        %v564 = vadd.f32 0.0, %v563
        %v565 = vpop.f32.mrf.mxu0
        %566 = vdwg.mxu0
        %v567 = vmul.f32 %v564, 0.35355338
        %v569 = vlaneseq
        %v570 = vshrl.u32 %v569, 7
        %v571 = vsub.s32 0, %v570
        %v572 = vrot.slane %v487, %v571
        %v574 = vadd.f32 %v567, %v572
        %v575 = vsel %vm491, %v574, -inf
        %576 = vmax.xlane.f32.xlu0 %v575
        %v577 = vpop.xlane.xlu0 %576
        %v578 = vsub.f32 %v574, %v577
        %v579 = vmul.f32 %v578, 1.442695
        %v580 = vpow.pop %v579
        %v581 = vsel %vm491, %v580, 0.0
        %582 = vadd.xlane.f32.xlu0 %v581
        %v583 = vpop.xlane.xlu0 %582
        %v584 = vrcp.pop %v583
        %v585 = vmul.f32 %v580, %v584
        %v587 = vsel %vm491, %v585, 0
        %589 = vmatprep.subr.mxu0 0.0
        %590 = vmatpush1.msra.mxu0 0.0
        %591 = vmatprep.subr.mxu0 0.0
        %592 = vmatpush1.msra.mxu0 0.0
        %593 = vmatprep.subr.mxu0 0.0
        %594 = vmatpush1.msra.mxu0 0.0
        %595 = vmatprep.subr.mxu0 0.0
        %596 = vmatpush1.msra.mxu0 0.0
        %597 = vmatprep.subr.mxu0 0.0
        %598 = vmatpush1.msra.mxu0 0.0
        %599 = vmatprep.subr.mxu0 0.0
        %600 = vmatpush1.msra.mxu0 0.0
        %601 = vmatprep.subr.mxu0 0.0
        %602 = vmatpush1.msra.mxu0 0.0
        %603 = vmatprep.subr.mxu0 0.0
        %604 = vmatpush1.msra.mxu0 0.0
        %605 = vmatprep.subr.mxu0 0.0
        %606 = vmatpush1.msra.mxu0 0.0
        %607 = vmatprep.subr.mxu0 0.0
        %608 = vmatpush1.msra.mxu0 0.0
        %609 = vmatprep.subr.mxu0 0.0
        %610 = vmatpush1.msra.mxu0 0.0
        %611 = vmatprep.subr.mxu0 0.0
        %612 = vmatpush1.msra.mxu0 0.0
        %613 = vmatprep.subr.mxu0 0.0
        %614 = vmatpush1.msra.mxu0 0.0
        %615 = vmatprep.subr.mxu0 0.0
        %616 = vmatpush1.msra.mxu0 0.0
        %617 = vmatprep.subr.mxu0 0.0
        %618 = vmatpush1.msra.mxu0 0.0
        %619 = vmatprep.subr.mxu0 0.0
        %620 = vmatpush1.msra.mxu0 %v458
        %621 = vmatprep.subr.mxu0 0.0
        %622 = vmatpush2.msra.mxu0 0.0
        %623 = vmatprep.subr.mxu0 0.0
        %624 = vmatpush2.msra.mxu0 0.0
        %625 = vmatprep.subr.mxu0 0.0
        %626 = vmatpush2.msra.mxu0 0.0
        %627 = vmatprep.subr.mxu0 0.0
        %628 = vmatpush2.msra.mxu0 0.0
        %629 = vmatprep.subr.mxu0 0.0
        %630 = vmatpush2.msra.mxu0 0.0
        %631 = vmatprep.subr.mxu0 0.0
        %632 = vmatpush2.msra.mxu0 0.0
        %633 = vmatprep.subr.mxu0 0.0
        %634 = vmatpush2.msra.mxu0 0.0
        %635 = vmatprep.subr.mxu0 0.0
        %636 = vmatpush2.msra.mxu0 0.0
        %637 = vmatprep.subr.mxu0 0.0
        %638 = vmatpush2.msra.mxu0 0.0
        %639 = vmatprep.subr.mxu0 0.0
        %640 = vmatpush2.msra.mxu0 0.0
        %641 = vmatprep.subr.mxu0 0.0
        %642 = vmatpush2.msra.mxu0 0.0
        %643 = vmatprep.subr.mxu0 0.0
        %644 = vmatpush2.msra.mxu0 0.0
        %645 = vmatprep.subr.mxu0 0.0
        %646 = vmatpush2.msra.mxu0 0.0
        %647 = vmatprep.subr.mxu0 0.0
        %648 = vmatpush2.msra.mxu0 0.0
        %649 = vmatprep.subr.mxu0 0.0
        %650 = vmatpush2.msra.mxu0 0.0
        %651 = vmatprep.subr.mxu0 0.0
        %652 = vmatpush2.msra.mxu0 0.0
        %653 = vmatprep.mubr.f32.mxu0 0.0
        %654 = vmatmul.mubr.f32.gmra.mxu0 %v587
        %v655 = vpop.f32.mrf.mxu0
        %v656 = vadd.f32 0.0, %v655
        %v657 = vpop.f32.mrf.mxu0
        %658 = vdwg.mxu0
        %659 = vrot.lane.b32.xlu0 %v472, 120
        %v660 = vpop.permute.xlu0 %659
        %661 = vrot.lane.b32.xlu0 %v486, 56
        %v662 = vpop.permute.xlu0 %661
        %v663 = vsel %vm491, %v660, 0
        %v665 = vsel %vm491, %v662, 0
        %667 = vmatprep.subr.mxu0 0.0
        %668 = vmatpush1.xpose.msra.mxu0 0.0
        %669 = vmatprep.subr.mxu0 0.0
        %670 = vmatpush1.xpose.msra.mxu0 0.0
        %671 = vmatprep.subr.mxu0 0.0
        %672 = vmatpush1.xpose.msra.mxu0 0.0
        %673 = vmatprep.subr.mxu0 0.0
        %674 = vmatpush1.xpose.msra.mxu0 0.0
        %675 = vmatprep.subr.mxu0 0.0
        %676 = vmatpush1.xpose.msra.mxu0 0.0
        %677 = vmatprep.subr.mxu0 0.0
        %678 = vmatpush1.xpose.msra.mxu0 0.0
        %679 = vmatprep.subr.mxu0 0.0
        %680 = vmatpush1.xpose.msra.mxu0 0.0
        %681 = vmatprep.subr.mxu0 0.0
        %682 = vmatpush1.xpose.msra.mxu0 0.0
        %683 = vmatprep.subr.mxu0 0.0
        %684 = vmatpush1.xpose.msra.mxu0 0.0
        %685 = vmatprep.subr.mxu0 0.0
        %686 = vmatpush1.xpose.msra.mxu0 0.0
        %687 = vmatprep.subr.mxu0 0.0
        %688 = vmatpush1.xpose.msra.mxu0 0.0
        %689 = vmatprep.subr.mxu0 0.0
        %690 = vmatpush1.xpose.msra.mxu0 0.0
        %691 = vmatprep.subr.mxu0 0.0
        %692 = vmatpush1.xpose.msra.mxu0 0.0
        %693 = vmatprep.subr.mxu0 0.0
        %694 = vmatpush1.xpose.msra.mxu0 0.0
        %695 = vmatprep.subr.mxu0 0.0
        %696 = vmatpush1.xpose.msra.mxu0 0.0
        %697 = vmatprep.subr.mxu0 0.0
        %698 = vmatpush1.xpose.msra.mxu0 %v665
        %699 = vmatprep.subr.mxu0 0.0
        %700 = vmatpush2.xpose.msra.mxu0 0.0
        %701 = vmatprep.subr.mxu0 0.0
        %702 = vmatpush2.xpose.msra.mxu0 0.0
        %703 = vmatprep.subr.mxu0 0.0
        %704 = vmatpush2.xpose.msra.mxu0 0.0
        %705 = vmatprep.subr.mxu0 0.0
        %706 = vmatpush2.xpose.msra.mxu0 0.0
        %707 = vmatprep.subr.mxu0 0.0
        %708 = vmatpush2.xpose.msra.mxu0 0.0
        %709 = vmatprep.subr.mxu0 0.0
        %710 = vmatpush2.xpose.msra.mxu0 0.0
        %711 = vmatprep.subr.mxu0 0.0
        %712 = vmatpush2.xpose.msra.mxu0 0.0
        %713 = vmatprep.subr.mxu0 0.0
        %714 = vmatpush2.xpose.msra.mxu0 0.0
        %715 = vmatprep.subr.mxu0 0.0
        %716 = vmatpush2.xpose.msra.mxu0 0.0
        %717 = vmatprep.subr.mxu0 0.0
        %718 = vmatpush2.xpose.msra.mxu0 0.0
        %719 = vmatprep.subr.mxu0 0.0
        %720 = vmatpush2.xpose.msra.mxu0 0.0
        %721 = vmatprep.subr.mxu0 0.0
        %722 = vmatpush2.xpose.msra.mxu0 0.0
        %723 = vmatprep.subr.mxu0 0.0
        %724 = vmatpush2.xpose.msra.mxu0 0.0
        %725 = vmatprep.subr.mxu0 0.0
        %726 = vmatpush2.xpose.msra.mxu0 0.0
        %727 = vmatprep.subr.mxu0 0.0
        %728 = vmatpush2.xpose.msra.mxu0 0.0
        %729 = vmatprep.subr.mxu0 0.0
        %730 = vmatpush2.xpose.msra.mxu0 0.0
        %731 = vmatprep.mubr.f32.mxu0 0.0
        %732 = vmatmul.mubr.f32.gmra.mxu0 %v663
        %v733 = vpop.f32.mrf.mxu0
        %v734 = vadd.f32 0.0, %v733
        %v735 = vpop.f32.mrf.mxu0
        %736 = vdwg.mxu0
        %v737 = vmul.f32 %v734, 0.35355338
        %v738 = vadd.f32 %v737, %v572
        %v739 = vsel %vm491, %v738, -inf
        %740 = vmax.xlane.f32.xlu0 %v739
        %v741 = vpop.xlane.xlu0 %740
        %v742 = vsub.f32 %v738, %v741
        %v743 = vmul.f32 %v742, 1.442695
        %v744 = vpow.pop %v743
        %v745 = vsel %vm491, %v744, 0.0
        %746 = vadd.xlane.f32.xlu0 %v745
        %v747 = vpop.xlane.xlu0 %746
        %v748 = vrcp.pop %v747
        %v749 = vmul.f32 %v744, %v748
        %751 = vrot.lane.b32.xlu0 %v458, 120
        %v752 = vpop.permute.xlu0 %751
        %v755 = vsel %vm491, %v749, 0
        %757 = vmatprep.subr.mxu0 0.0
        %758 = vmatpush1.msra.mxu0 0.0
        %759 = vmatprep.subr.mxu0 0.0
        %760 = vmatpush1.msra.mxu0 0.0
        %761 = vmatprep.subr.mxu0 0.0
        %762 = vmatpush1.msra.mxu0 0.0
        %763 = vmatprep.subr.mxu0 0.0
        %764 = vmatpush1.msra.mxu0 0.0
        %765 = vmatprep.subr.mxu0 0.0
        %766 = vmatpush1.msra.mxu0 0.0
        %767 = vmatprep.subr.mxu0 0.0
        %768 = vmatpush1.msra.mxu0 0.0
        %769 = vmatprep.subr.mxu0 0.0
        %770 = vmatpush1.msra.mxu0 0.0
        %771 = vmatprep.subr.mxu0 0.0
        %772 = vmatpush1.msra.mxu0 0.0
        %773 = vmatprep.subr.mxu0 0.0
        %774 = vmatpush1.msra.mxu0 0.0
        %775 = vmatprep.subr.mxu0 0.0
        %776 = vmatpush1.msra.mxu0 0.0
        %777 = vmatprep.subr.mxu0 0.0
        %778 = vmatpush1.msra.mxu0 0.0
        %779 = vmatprep.subr.mxu0 0.0
        %780 = vmatpush1.msra.mxu0 0.0
        %781 = vmatprep.subr.mxu0 0.0
        %782 = vmatpush1.msra.mxu0 0.0
        %783 = vmatprep.subr.mxu0 0.0
        %784 = vmatpush1.msra.mxu0 0.0
        %785 = vmatprep.subr.mxu0 0.0
        %786 = vmatpush1.msra.mxu0 0.0
        %787 = vmatprep.subr.mxu0 0.0
        %788 = vmatpush1.msra.mxu0 %v752
        %789 = vmatprep.subr.mxu0 0.0
        %790 = vmatpush2.msra.mxu0 0.0
        %791 = vmatprep.subr.mxu0 0.0
        %792 = vmatpush2.msra.mxu0 0.0
        %793 = vmatprep.subr.mxu0 0.0
        %794 = vmatpush2.msra.mxu0 0.0
        %795 = vmatprep.subr.mxu0 0.0
        %796 = vmatpush2.msra.mxu0 0.0
        %797 = vmatprep.subr.mxu0 0.0
        %798 = vmatpush2.msra.mxu0 0.0
        %799 = vmatprep.subr.mxu0 0.0
        %800 = vmatpush2.msra.mxu0 0.0
        %801 = vmatprep.subr.mxu0 0.0
        %802 = vmatpush2.msra.mxu0 0.0
        %803 = vmatprep.subr.mxu0 0.0
        %804 = vmatpush2.msra.mxu0 0.0
        %805 = vmatprep.subr.mxu0 0.0
        %806 = vmatpush2.msra.mxu0 0.0
        %807 = vmatprep.subr.mxu0 0.0
        %808 = vmatpush2.msra.mxu0 0.0
        %809 = vmatprep.subr.mxu0 0.0
        %810 = vmatpush2.msra.mxu0 0.0
        %811 = vmatprep.subr.mxu0 0.0
        %812 = vmatpush2.msra.mxu0 0.0
        %813 = vmatprep.subr.mxu0 0.0
        %814 = vmatpush2.msra.mxu0 0.0
        %815 = vmatprep.subr.mxu0 0.0
        %816 = vmatpush2.msra.mxu0 0.0
        %817 = vmatprep.subr.mxu0 0.0
        %818 = vmatpush2.msra.mxu0 0.0
        %819 = vmatprep.subr.mxu0 0.0
        %820 = vmatpush2.msra.mxu0 0.0
        %821 = vmatprep.mubr.f32.mxu0 0.0
        %822 = vmatmul.mubr.f32.gmra.mxu0 %v755
        %v823 = vpop.f32.mrf.mxu0
        %v824 = vadd.f32 0.0, %v823
        %v825 = vpop.f32.mrf.mxu0
        %826 = vdwg.mxu0
        %827 = vrot.lane.b32.xlu0 %v472, 112
        %v828 = vpop.permute.xlu0 %827
        %829 = vrot.lane.b32.xlu0 %v486, 48
        %v830 = vpop.permute.xlu0 %829
        %v831 = vsel %vm491, %v828, 0
        %v833 = vsel %vm491, %v830, 0
        %835 = vmatprep.subr.mxu0 0.0
        %836 = vmatpush1.xpose.msra.mxu0 0.0
        %837 = vmatprep.subr.mxu0 0.0
        %838 = vmatpush1.xpose.msra.mxu0 0.0
        %839 = vmatprep.subr.mxu0 0.0
        %840 = vmatpush1.xpose.msra.mxu0 0.0
        %841 = vmatprep.subr.mxu0 0.0
        %842 = vmatpush1.xpose.msra.mxu0 0.0
        %843 = vmatprep.subr.mxu0 0.0
        %844 = vmatpush1.xpose.msra.mxu0 0.0
        %845 = vmatprep.subr.mxu0 0.0
        %846 = vmatpush1.xpose.msra.mxu0 0.0
        %847 = vmatprep.subr.mxu0 0.0
        %848 = vmatpush1.xpose.msra.mxu0 0.0
        %849 = vmatprep.subr.mxu0 0.0
        %850 = vmatpush1.xpose.msra.mxu0 0.0
        %851 = vmatprep.subr.mxu0 0.0
        %852 = vmatpush1.xpose.msra.mxu0 0.0
        %853 = vmatprep.subr.mxu0 0.0
        %854 = vmatpush1.xpose.msra.mxu0 0.0
        %855 = vmatprep.subr.mxu0 0.0
        %856 = vmatpush1.xpose.msra.mxu0 0.0
        %857 = vmatprep.subr.mxu0 0.0
        %858 = vmatpush1.xpose.msra.mxu0 0.0
        %859 = vmatprep.subr.mxu0 0.0
        %860 = vmatpush1.xpose.msra.mxu0 0.0
        %861 = vmatprep.subr.mxu0 0.0
        %862 = vmatpush1.xpose.msra.mxu0 0.0
        %863 = vmatprep.subr.mxu0 0.0
        %864 = vmatpush1.xpose.msra.mxu0 0.0
        %865 = vmatprep.subr.mxu0 0.0
        %866 = vmatpush1.xpose.msra.mxu0 %v833
        %867 = vmatprep.subr.mxu0 0.0
        %868 = vmatpush2.xpose.msra.mxu0 0.0
        %869 = vmatprep.subr.mxu0 0.0
        %870 = vmatpush2.xpose.msra.mxu0 0.0
        %871 = vmatprep.subr.mxu0 0.0
        %872 = vmatpush2.xpose.msra.mxu0 0.0
        %873 = vmatprep.subr.mxu0 0.0
        %874 = vmatpush2.xpose.msra.mxu0 0.0
        %875 = vmatprep.subr.mxu0 0.0
        %876 = vmatpush2.xpose.msra.mxu0 0.0
        %877 = vmatprep.subr.mxu0 0.0
        %878 = vmatpush2.xpose.msra.mxu0 0.0
        %879 = vmatprep.subr.mxu0 0.0
        %880 = vmatpush2.xpose.msra.mxu0 0.0
        %881 = vmatprep.subr.mxu0 0.0
        %882 = vmatpush2.xpose.msra.mxu0 0.0
        %883 = vmatprep.subr.mxu0 0.0
        %884 = vmatpush2.xpose.msra.mxu0 0.0
        %885 = vmatprep.subr.mxu0 0.0
        %886 = vmatpush2.xpose.msra.mxu0 0.0
        %887 = vmatprep.subr.mxu0 0.0
        %888 = vmatpush2.xpose.msra.mxu0 0.0
        %889 = vmatprep.subr.mxu0 0.0
        %890 = vmatpush2.xpose.msra.mxu0 0.0
        %891 = vmatprep.subr.mxu0 0.0
        %892 = vmatpush2.xpose.msra.mxu0 0.0
        %893 = vmatprep.subr.mxu0 0.0
        %894 = vmatpush2.xpose.msra.mxu0 0.0
        %895 = vmatprep.subr.mxu0 0.0
        %896 = vmatpush2.xpose.msra.mxu0 0.0
        %897 = vmatprep.subr.mxu0 0.0
        %898 = vmatpush2.xpose.msra.mxu0 0.0
        %899 = vmatprep.mubr.f32.mxu0 0.0
        %900 = vmatmul.mubr.f32.gmra.mxu0 %v831
        %v901 = vpop.f32.mrf.mxu0
        %v902 = vadd.f32 0.0, %v901
        %v903 = vpop.f32.mrf.mxu0
        %904 = vdwg.mxu0
        %v905 = vmul.f32 %v902, 0.35355338
        %v906 = vadd.f32 %v905, %v572
        %v907 = vsel %vm491, %v906, -inf
        %908 = vmax.xlane.f32.xlu0 %v907
        %v909 = vpop.xlane.xlu0 %908
        %v910 = vsub.f32 %v906, %v909
        %v911 = vmul.f32 %v910, 1.442695
        %v912 = vpow.pop %v911
        %v913 = vsel %vm491, %v912, 0.0
        %914 = vadd.xlane.f32.xlu0 %v913
        %v915 = vpop.xlane.xlu0 %914
        %v916 = vrcp.pop %v915
        %v917 = vmul.f32 %v912, %v916
        %918 = vrot.lane.b32.xlu0 %v458, 112
        %v919 = vpop.permute.xlu0 %918
        %v922 = vsel %vm491, %v917, 0
        %924 = vmatprep.subr.mxu0 0.0
        %925 = vmatpush1.msra.mxu0 0.0
        %926 = vmatprep.subr.mxu0 0.0
        %927 = vmatpush1.msra.mxu0 0.0
        %928 = vmatprep.subr.mxu0 0.0
        %929 = vmatpush1.msra.mxu0 0.0
        %930 = vmatprep.subr.mxu0 0.0
        %931 = vmatpush1.msra.mxu0 0.0
        %932 = vmatprep.subr.mxu0 0.0
        %933 = vmatpush1.msra.mxu0 0.0
        %934 = vmatprep.subr.mxu0 0.0
        %935 = vmatpush1.msra.mxu0 0.0
        %936 = vmatprep.subr.mxu0 0.0
        %937 = vmatpush1.msra.mxu0 0.0
        %938 = vmatprep.subr.mxu0 0.0
        %939 = vmatpush1.msra.mxu0 0.0
        %940 = vmatprep.subr.mxu0 0.0
        %941 = vmatpush1.msra.mxu0 0.0
        %942 = vmatprep.subr.mxu0 0.0
        %943 = vmatpush1.msra.mxu0 0.0
        %944 = vmatprep.subr.mxu0 0.0
        %945 = vmatpush1.msra.mxu0 0.0
        %946 = vmatprep.subr.mxu0 0.0
        %947 = vmatpush1.msra.mxu0 0.0
        %948 = vmatprep.subr.mxu0 0.0
        %949 = vmatpush1.msra.mxu0 0.0
        %950 = vmatprep.subr.mxu0 0.0
        %951 = vmatpush1.msra.mxu0 0.0
        %952 = vmatprep.subr.mxu0 0.0
        %953 = vmatpush1.msra.mxu0 0.0
        %954 = vmatprep.subr.mxu0 0.0
        %955 = vmatpush1.msra.mxu0 %v919
        %956 = vmatprep.subr.mxu0 0.0
        %957 = vmatpush2.msra.mxu0 0.0
        %958 = vmatprep.subr.mxu0 0.0
        %959 = vmatpush2.msra.mxu0 0.0
        %960 = vmatprep.subr.mxu0 0.0
        %961 = vmatpush2.msra.mxu0 0.0
        %962 = vmatprep.subr.mxu0 0.0
        %963 = vmatpush2.msra.mxu0 0.0
        %964 = vmatprep.subr.mxu0 0.0
        %965 = vmatpush2.msra.mxu0 0.0
        %966 = vmatprep.subr.mxu0 0.0
        %967 = vmatpush2.msra.mxu0 0.0
        %968 = vmatprep.subr.mxu0 0.0
        %969 = vmatpush2.msra.mxu0 0.0
        %970 = vmatprep.subr.mxu0 0.0
        %971 = vmatpush2.msra.mxu0 0.0
        %972 = vmatprep.subr.mxu0 0.0
        %973 = vmatpush2.msra.mxu0 0.0
        %974 = vmatprep.subr.mxu0 0.0
        %975 = vmatpush2.msra.mxu0 0.0
        %976 = vmatprep.subr.mxu0 0.0
        %977 = vmatpush2.msra.mxu0 0.0
        %978 = vmatprep.subr.mxu0 0.0
        %979 = vmatpush2.msra.mxu0 0.0
        %980 = vmatprep.subr.mxu0 0.0
        %981 = vmatpush2.msra.mxu0 0.0
        %982 = vmatprep.subr.mxu0 0.0
        %983 = vmatpush2.msra.mxu0 0.0
        %984 = vmatprep.subr.mxu0 0.0
        %985 = vmatpush2.msra.mxu0 0.0
        %986 = vmatprep.subr.mxu0 0.0
        %987 = vmatpush2.msra.mxu0 0.0
        %988 = vmatprep.mubr.f32.mxu0 0.0
        %989 = vmatmul.mubr.f32.gmra.mxu0 %v922
        %v990 = vpop.f32.mrf.mxu0
        %v991 = vadd.f32 0.0, %v990
        %v992 = vpop.f32.mrf.mxu0
        %993 = vdwg.mxu0
        %994 = vrot.lane.b32.xlu0 %v472, 104
        %v995 = vpop.permute.xlu0 %994
        %996 = vrot.lane.b32.xlu0 %v486, 40
        %v997 = vpop.permute.xlu0 %996
        %v998 = vsel %vm491, %v995, 0
        %v1000 = vsel %vm491, %v997, 0
        %1002 = vmatprep.subr.mxu0 0.0
        %1003 = vmatpush1.xpose.msra.mxu0 0.0
        %1004 = vmatprep.subr.mxu0 0.0
        %1005 = vmatpush1.xpose.msra.mxu0 0.0
        %1006 = vmatprep.subr.mxu0 0.0
        %1007 = vmatpush1.xpose.msra.mxu0 0.0
        %1008 = vmatprep.subr.mxu0 0.0
        %1009 = vmatpush1.xpose.msra.mxu0 0.0
        %1010 = vmatprep.subr.mxu0 0.0
        %1011 = vmatpush1.xpose.msra.mxu0 0.0
        %1012 = vmatprep.subr.mxu0 0.0
        %1013 = vmatpush1.xpose.msra.mxu0 0.0
        %1014 = vmatprep.subr.mxu0 0.0
        %1015 = vmatpush1.xpose.msra.mxu0 0.0
        %1016 = vmatprep.subr.mxu0 0.0
        %1017 = vmatpush1.xpose.msra.mxu0 0.0
        %1018 = vmatprep.subr.mxu0 0.0
        %1019 = vmatpush1.xpose.msra.mxu0 0.0
        %1020 = vmatprep.subr.mxu0 0.0
        %1021 = vmatpush1.xpose.msra.mxu0 0.0
        %1022 = vmatprep.subr.mxu0 0.0
        %1023 = vmatpush1.xpose.msra.mxu0 0.0
        %1024 = vmatprep.subr.mxu0 0.0
        %1025 = vmatpush1.xpose.msra.mxu0 0.0
        %1026 = vmatprep.subr.mxu0 0.0
        %1027 = vmatpush1.xpose.msra.mxu0 0.0
        %1028 = vmatprep.subr.mxu0 0.0
        %1029 = vmatpush1.xpose.msra.mxu0 0.0
        %1030 = vmatprep.subr.mxu0 0.0
        %1031 = vmatpush1.xpose.msra.mxu0 0.0
        %1032 = vmatprep.subr.mxu0 0.0
        %1033 = vmatpush1.xpose.msra.mxu0 %v1000
        %1034 = vmatprep.subr.mxu0 0.0
        %1035 = vmatpush2.xpose.msra.mxu0 0.0
        %1036 = vmatprep.subr.mxu0 0.0
        %1037 = vmatpush2.xpose.msra.mxu0 0.0
        %1038 = vmatprep.subr.mxu0 0.0
        %1039 = vmatpush2.xpose.msra.mxu0 0.0
        %1040 = vmatprep.subr.mxu0 0.0
        %1041 = vmatpush2.xpose.msra.mxu0 0.0
        %1042 = vmatprep.subr.mxu0 0.0
        %1043 = vmatpush2.xpose.msra.mxu0 0.0
        %1044 = vmatprep.subr.mxu0 0.0
        %1045 = vmatpush2.xpose.msra.mxu0 0.0
        %1046 = vmatprep.subr.mxu0 0.0
        %1047 = vmatpush2.xpose.msra.mxu0 0.0
        %1048 = vmatprep.subr.mxu0 0.0
        %1049 = vmatpush2.xpose.msra.mxu0 0.0
        %1050 = vmatprep.subr.mxu0 0.0
        %1051 = vmatpush2.xpose.msra.mxu0 0.0
        %1052 = vmatprep.subr.mxu0 0.0
        %1053 = vmatpush2.xpose.msra.mxu0 0.0
        %1054 = vmatprep.subr.mxu0 0.0
        %1055 = vmatpush2.xpose.msra.mxu0 0.0
        %1056 = vmatprep.subr.mxu0 0.0
        %1057 = vmatpush2.xpose.msra.mxu0 0.0
        %1058 = vmatprep.subr.mxu0 0.0
        %1059 = vmatpush2.xpose.msra.mxu0 0.0
        %1060 = vmatprep.subr.mxu0 0.0
        %1061 = vmatpush2.xpose.msra.mxu0 0.0
        %1062 = vmatprep.subr.mxu0 0.0
        %1063 = vmatpush2.xpose.msra.mxu0 0.0
        %1064 = vmatprep.subr.mxu0 0.0
        %1065 = vmatpush2.xpose.msra.mxu0 0.0
        %1066 = vmatprep.mubr.f32.mxu0 0.0
        %1067 = vmatmul.mubr.f32.gmra.mxu0 %v998
        %v1068 = vpop.f32.mrf.mxu0
        %v1069 = vadd.f32 0.0, %v1068
        %v1070 = vpop.f32.mrf.mxu0
        %1071 = vdwg.mxu0
        %v1072 = vmul.f32 %v1069, 0.35355338
        %v1073 = vadd.f32 %v1072, %v572
        %v1074 = vsel %vm491, %v1073, -inf
        %1075 = vmax.xlane.f32.xlu0 %v1074
        %v1076 = vpop.xlane.xlu0 %1075
        %v1077 = vsub.f32 %v1073, %v1076
        %v1078 = vmul.f32 %v1077, 1.442695
        %v1079 = vpow.pop %v1078
        %v1080 = vsel %vm491, %v1079, 0.0
        %1081 = vadd.xlane.f32.xlu0 %v1080
        %v1082 = vpop.xlane.xlu0 %1081
        %v1083 = vrcp.pop %v1082
        %v1084 = vmul.f32 %v1079, %v1083
        %1085 = vrot.lane.b32.xlu0 %v458, 104
        %v1086 = vpop.permute.xlu0 %1085
        %v1089 = vsel %vm491, %v1084, 0
        %1091 = vmatprep.subr.mxu0 0.0
        %1092 = vmatpush1.msra.mxu0 0.0
        %1093 = vmatprep.subr.mxu0 0.0
        %1094 = vmatpush1.msra.mxu0 0.0
        %1095 = vmatprep.subr.mxu0 0.0
        %1096 = vmatpush1.msra.mxu0 0.0
        %1097 = vmatprep.subr.mxu0 0.0
        %1098 = vmatpush1.msra.mxu0 0.0
        %1099 = vmatprep.subr.mxu0 0.0
        %1100 = vmatpush1.msra.mxu0 0.0
        %1101 = vmatprep.subr.mxu0 0.0
        %1102 = vmatpush1.msra.mxu0 0.0
        %1103 = vmatprep.subr.mxu0 0.0
        %1104 = vmatpush1.msra.mxu0 0.0
        %1105 = vmatprep.subr.mxu0 0.0
        %1106 = vmatpush1.msra.mxu0 0.0
        %1107 = vmatprep.subr.mxu0 0.0
        %1108 = vmatpush1.msra.mxu0 0.0
        %1109 = vmatprep.subr.mxu0 0.0
        %1110 = vmatpush1.msra.mxu0 0.0
        %1111 = vmatprep.subr.mxu0 0.0
        %1112 = vmatpush1.msra.mxu0 0.0
        %1113 = vmatprep.subr.mxu0 0.0
        %1114 = vmatpush1.msra.mxu0 0.0
        %1115 = vmatprep.subr.mxu0 0.0
        %1116 = vmatpush1.msra.mxu0 0.0
        %1117 = vmatprep.subr.mxu0 0.0
        %1118 = vmatpush1.msra.mxu0 0.0
        %1119 = vmatprep.subr.mxu0 0.0
        %1120 = vmatpush1.msra.mxu0 0.0
        %1121 = vmatprep.subr.mxu0 0.0
        %1122 = vmatpush1.msra.mxu0 %v1086
        %1123 = vmatprep.subr.mxu0 0.0
        %1124 = vmatpush2.msra.mxu0 0.0
        %1125 = vmatprep.subr.mxu0 0.0
        %1126 = vmatpush2.msra.mxu0 0.0
        %1127 = vmatprep.subr.mxu0 0.0
        %1128 = vmatpush2.msra.mxu0 0.0
        %1129 = vmatprep.subr.mxu0 0.0
        %1130 = vmatpush2.msra.mxu0 0.0
        %1131 = vmatprep.subr.mxu0 0.0
        %1132 = vmatpush2.msra.mxu0 0.0
        %1133 = vmatprep.subr.mxu0 0.0
        %1134 = vmatpush2.msra.mxu0 0.0
        %1135 = vmatprep.subr.mxu0 0.0
        %1136 = vmatpush2.msra.mxu0 0.0
        %1137 = vmatprep.subr.mxu0 0.0
        %1138 = vmatpush2.msra.mxu0 0.0
        %1139 = vmatprep.subr.mxu0 0.0
        %1140 = vmatpush2.msra.mxu0 0.0
        %1141 = vmatprep.subr.mxu0 0.0
        %1142 = vmatpush2.msra.mxu0 0.0
        %1143 = vmatprep.subr.mxu0 0.0
        %1144 = vmatpush2.msra.mxu0 0.0
        %1145 = vmatprep.subr.mxu0 0.0
        %1146 = vmatpush2.msra.mxu0 0.0
        %1147 = vmatprep.subr.mxu0 0.0
        %1148 = vmatpush2.msra.mxu0 0.0
        %1149 = vmatprep.subr.mxu0 0.0
        %1150 = vmatpush2.msra.mxu0 0.0
        %1151 = vmatprep.subr.mxu0 0.0
        %1152 = vmatpush2.msra.mxu0 0.0
        %1153 = vmatprep.subr.mxu0 0.0
        %1154 = vmatpush2.msra.mxu0 0.0
        %1155 = vmatprep.mubr.f32.mxu0 0.0
        %1156 = vmatmul.mubr.f32.gmra.mxu0 %v1089
        %v1157 = vpop.f32.mrf.mxu0
        %v1158 = vadd.f32 0.0, %v1157
        %v1159 = vpop.f32.mrf.mxu0
        %1160 = vdwg.mxu0
        %1162 = vrot.lane.b32.xlu0 %v824, 8
        %v1163 = vpop.permute.xlu0 %1162
        %1166 = vrot.lane.b32.xlu0 %v991, 16
        %v1167 = vpop.permute.xlu0 %1166
        %1170 = vrot.lane.b32.xlu0 %v1158, 24
        %v1171 = vpop.permute.xlu0 %1170
        %v1173 = vsel %vm491, %v656, %v1163
        %vm1174 = vcmask 130048
        %v1175 = vsel %vm1174, %v1173, %v1167
        %vm1176 = vcmask 195584
        %v1177 = vsel %vm1176, %v1175, %v1171
        %1178 = vst.msk [vmem:[%s360] sm:$0xff] %vm385, %v1177
        %s1179 = sand.u32 %s178, 1
        %s1180 = scalar_lea.sflag [#allocation4], %s1179
        %s1181 = sand.u32 %s178, 1
        %s1182 = smul.addr %s1181, 8
        %s1183 = scalar_lea.vmem [#allocation9], %s1182
        // Predicated region
        $region61: #{tpu_custom_call.1} parent=43 // pred_check
          %p1184 = pneg %p188
        $region62: #{tpu_custom_call.1} parent=43 // pred_check_branch
          %1186 = sbr.rel (%p1184) target = $region64
        $region63: #{tpu_custom_call.1} parent=43 // pred_region
          %s1188 = ssub.s32 128, 128
          %1189 = vsyncadd %s1180, %s1188
          %s1190 = smul.addr %s24, 128
          %s1191 = scalar_lea.hbm %s6, %s1190
          %s1193 = sshll.u32 %s1183, 4
          %s1194 = int_to_ptr.vmem [resolvable:$true] %s1193
          %1196 = dma.vmem_to_hbm [thread:$0]  %s1194, 128, %s1191, %s1180
        $region64: #{tpu_custom_call.1} parent=43 // pred_fallthru
          _
      $region44: #{tpu_custom_call.1} parent=5 // pred_fallthru
        _
      %p1197 = scmp.le.s32.totalorder 2, %s19
      // Predicated region
      $region65: #{tpu_custom_call.1} parent=5 // pred_check
        %p1198 = pneg %p1197
      $region66: #{tpu_custom_call.1} parent=5 // pred_check_branch
        %1200 = sbr.rel (%p1198) target = $region68
      $region67: #{tpu_custom_call.1} parent=5 // pred_region
        %s1201 = ssub.s32 %s19, 2
        // Predicated region
        $region69: #{tpu_custom_call.1} parent=67 // pred_check
          %p1202 = pneg %p194
        $region70: #{tpu_custom_call.1} parent=67 // pred_check_branch
          %1204 = sbr.rel (%p1202) target = $region72
        $region71: #{tpu_custom_call.1} parent=67 // pred_region
          %s1205 = sand.u32 %s179, 1
          %s1206 = scalar_lea.sflag [#allocation4], %s1205
          %s1207 = sand.u32 %s179, 1
          %s1208 = smul.addr %s1207, 8
          %s1209 = scalar_lea.vmem [#allocation9], %s1208
          %1210 = dma.done %s1206, 128
        $region72: #{tpu_custom_call.1} parent=67 // pred_fallthru
          _
      $region68: #{tpu_custom_call.1} parent=5 // pred_fallthru
        _
    $region6: #{tpu_custom_call.1} parent=1 // loop_footer
      %s23 = sadd.s32 1, %s19
    $region7: #{tpu_custom_call.1} parent=1 // loop_footer_branch
      %18 = sbr.rel target = $region3
    $region8: #{tpu_custom_call.1} parent=1 // loop_exit
      _
    %1211 = vsyncpa [#allocation3], 1
    %s1212 = scalar_lea.sflag [#allocation3], 1
    %1213 = vsyncpa %s1212, 1
    %1214 = vsyncpa [#allocation6], 1
    %1215 = vsyncpa [#allocation4], 1
    %s1216 = scalar_lea.sflag [#allocation4], 1
    %1217 = vsyncpa %s1216, 1

</llo_original>
